<compile_context>
chip_gen: v5e
topology: v5e:2x2
jax: 0.10.0
libtpu: 0.0.40
codegen_flags: <defaults>
</compile_context>

<pallas_src>
import functools
from dataclasses import dataclass

import jax
import jax.numpy as jnp
from jax import lax
from jax.experimental import pallas as pl
from jax.experimental.pallas import tpu as pltpu

N_JACOBI = 20        # fixed pressure-solve iterations
JACOBI_UNROLL = 4    # interleave adjacent iterations without vreg spills
assert N_JACOBI % JACOBI_UNROLL == 0


def _make_stencil_mats(h, w):
    """Circulant shift matrices so pressure-solve stencils ride the MXU.

       x @ lane_jac  == 0.25 * (roll(x,+1,-1) + roll(x,-1,-1))
       sub_jac @ x   == 0.25 * (roll(x,+1, 0) + roll(x,-1, 0))
       x @ lane_diff == 0.5  * (roll(x,-1,-1) - roll(x,+1,-1))

    Entries are 0 / ±0.25 / ±0.5 — exact in bf16, so DEFAULT (single-pass bf16)
    matmul precision only truncates the other operand's low mantissa bits.
    """
    eye_w = jnp.eye(w, dtype=jnp.float32)
    sp = jnp.roll(eye_w, 1, axis=1)     # x @ sp == roll(x, +1, axis=-1)
    sm = jnp.roll(eye_w, -1, axis=1)    # x @ sm == roll(x, -1, axis=-1)
    lane_jac = 0.25 * (sp + sm)
    lane_diff = 0.5 * (sm - sp)
    eye_h = jnp.eye(h, dtype=jnp.float32)
    sub_jac = 0.25 * (jnp.roll(eye_h, -1, axis=1) + jnp.roll(eye_h, 1, axis=1))
    return lane_jac, sub_jac, lane_diff


def _make_fluid_kernel(use_mxu_shift):
    """Kernel body. `use_mxu_shift` (static) selects MXU circulant matmuls vs
    XLU rolls for the pressure-solve stencils (MXU on v6e/v7x, rolls on v5e)."""

    def body(gate_ref, fscal_ref, src_ref, force_ref,
             lane_jac_ref, sub_jac_ref, lane_diff_ref,
             den_ref, vel_ref, den_out_ref, vel_out_ref):
        # SMEM scalars: gate[i] = 1 while t_i < source_time (precomputed on host),
        #               fscal = [force_rescale_factor, dt, buoyancy]
        rescale = fscal_ref[0]
        dt = fscal_ref[1]
        buoy = fscal_ref[2]
        n_steps = gate_ref.shape[0]

        H = den_ref.shape[-2]
        W = den_ref.shape[-1]

        def rolly(x, s):                     # sublane axis (H) -> XLU
            return pltpu.roll(x, s % H, 0)

        def rollx(x, s):                     # lane axis (W)    -> XLU
            return pltpu.roll(x, s % W, 1)

        def lane_diff_half(x):               # 0.5*(roll(x,-1,-1) - roll(x,+1,-1))
            if use_mxu_shift:
                return jnp.dot(x, lane_diff_ref[...],
                               preferred_element_type=jnp.float32)
            return 0.5 * (rollx(x, -1) - rollx(x, 1))

        # Simulation state lives in the OUTPUT VMEM blocks across fused timesteps,
        # so a multi-step rollout never round-trips through HBM.
        den_out_ref[...] = den_ref[...]
        vel_out_ref[...] = vel_ref[...]

        @pl.loop(0, n_steps)
        def _step(i):
            u = vel_out_ref[0]
            v = vel_out_ref[1]

            # --- applySource: skipped entirely once t >= source_time ----------
            @pl.when(gate_ref[i] != 0)
            def _():
                den_out_ref[0] = den_out_ref[0] + src_ref[0]

            den = den_out_ref[0]

            # --- advectValues (first-order upwind, periodic) -------------------
            # upwind masks computed once, reused for den / u / v advection
            um = u > 0.0
            vm = v > 0.0

            # lane-axis rolls of den/u/v batched into ONE (3H, W) roll pair
            # (lane rolls are row-independent); sublane rolls stay per-channel
            # because stacking along sublane would wrap channels into each other.
            q_all = jnp.concatenate([den, u, v], axis=0)
            qxp = rollx(q_all, 1)
            qxm = rollx(q_all, -1)

            def advect(q, qp, qm):
                dqx = jnp.where(um, q - qp, qm - q)
                dqy = jnp.where(vm, q - rolly(q, 1), rolly(q, -1) - q)
                return q - dt * (u * dqx + v * dqy)

            den = advect(den, qxp[:H], qxm[:H])
            u_new = advect(u, qxp[H:2 * H], qxm[H:2 * H])
            v_new = advect(v, qxp[2 * H:], qxm[2 * H:])

            # density is dead during the pressure solve: park it in the output
            # block now so it is not live across the Jacobi loop.
            den_out_ref[0] = den

            # --- addBuoyancy + addForce (force loaded at its use site) --------
            v = v_new + dt * buoy * den + dt * (force_ref[1] * rescale)
            u = u_new + dt * (force_ref[0] * rescale)

            # --- solvePressure (Jacobi, periodic) -------------------------------
            div = lane_diff_half(u) + 0.5 * (rolly(v, -1) - rolly(v, 1))

            # u, v are dead during the Jacobi loop: park them in the output
            # block to free ~16 vregs (avoids spill vld/vst under the 4x unroll).
            vel_out_ref[0] = u
            vel_out_ref[1] = v

            if use_mxu_shift:
                div4 = 0.25 * div

                # Jacobi body = 2 independent MXU matmuls (lane + sublane
                # neighbor sums, 0.25 baked in) + 1 VPU add/sub, zero XLU.
                # DEFAULT matmul precision: single-pass bf16, ~3-6x fewer MXU
                # pushes per iteration than the previous HIGHEST setting.
                # TODO(synk): stage the circulant RHS once with
                # pltpu.matmul_push_rhs and accumulate both products into the
                # same MRB address on v7x (matmul_acc_lhs / matmul_pop).
                def jacobi_chunk(_, p):
                    for _u in range(JACOBI_UNROLL):       # explicit 4x unroll
                        lane = jnp.dot(p, lane_jac_ref[...],
                                       preferred_element_type=jnp.float32)
                        sub = jnp.dot(sub_jac_ref[...], p,
                                      preferred_element_type=jnp.float32)
                        p = lane + sub - div4
                    return p
            else:
                def jacobi_chunk(_, p):
                    for _u in range(JACOBI_UNROLL):       # explicit 4x unroll
                        p = 0.25 * (rollx(p, 1) + rollx(p, -1) +
                                    rolly(p, 1) + rolly(p, -1) - div)
                    return p

            # TODO(synk): warm-start from the previous step's p (VMEM scratch)
            # to cut N_JACOBI; changes the numerical trajectory, validate apart.
            p = lax.fori_loop(0, N_JACOBI // JACOBI_UNROLL, jacobi_chunk,
                              jnp.zeros_like(div))

            u = vel_out_ref[0] - lane_diff_half(p)
            v = vel_out_ref[1] - 0.5 * (rolly(p, -1) - rolly(p, 1))

            vel_out_ref[0] = u
            vel_out_ref[1] = v

    if use_mxu_shift:
        return body

    # roll-only path (v5e): no circulant matrices are shipped at all.
    def body_rolls(gate_ref, fscal_ref, src_ref, force_ref,
                   den_ref, vel_ref, den_out_ref, vel_out_ref):
        return body(gate_ref, fscal_ref, src_ref, force_ref,
                    None, None, None, den_ref, vel_ref, den_out_ref, vel_out_ref)

    return body_rolls


@functools.partial(jax.jit, static_argnames=("use_mxu_shift",))
def fluid_steps(gate, fscal, source, force, density, vel,
                lane_jac=None, sub_jac=None, lane_diff=None, *,
                use_mxu_shift=True):
    """Run gate.shape[0] fused simulation steps in one pallas_call."""
    _, H, W = density.shape
    vmem = pl.BlockSpec(memory_space=pltpu.MemorySpace.VMEM)
    smem = pl.BlockSpec(memory_space=pltpu.MemorySpace.SMEM)
    out_shape = (jax.ShapeDtypeStruct((1, H, W), jnp.float32),
                 jax.ShapeDtypeStruct((2, H, W), jnp.float32))
    kernel = _make_fluid_kernel(use_mxu_shift)
    if use_mxu_shift:
        return pl.pallas_call(
            kernel, out_shape=out_shape,
            in_specs=[smem, smem, vmem, vmem, vmem, vmem, vmem, vmem, vmem],
            out_specs=(vmem, vmem),
            # density / vel updated in place (no fresh HBM output buffers per call)
            input_output_aliases={7: 0, 8: 1},
        )(gate, fscal, source, force, lane_jac, sub_jac, lane_diff, density, vel)
    # v5e roll path: skip the (unused) circulant matrices entirely.
    return pl.pallas_call(
        kernel, out_shape=out_shape,
        in_specs=[smem, smem, vmem, vmem, vmem, vmem],
        out_specs=(vmem, vmem),
        input_output_aliases={4: 0, 5: 1},
    )(gate, fscal, source, force, density, vel)


@dataclass
class SolverConfig:
    dim: int = 2
    res_x: int = 127     # -> W = 128 (lane dim)
    res_y: int = 63      # -> H = 64  (sublane dim)
    dt: float = 0.1
    buoyancy: float = 1.0


def _default_use_mxu_shift():
    """MXU circulant path on v6e/v7x; pure-roll path on v5e (weak 4x128 MXU,
    3 XLUs, no bf16 VPU)."""
    try:
        kind = jax.devices()[0].device_kind.lower()
    except Exception:
        return True
    return not ("v5 lite" in kind or "v5e" in kind or "v5lite" in kind)


class StaticForceField:
    """JAX/Pallas port of the PyTorch `Model` (static force field)."""

    def __init__(self, solver_cfg: SolverConfig, source, source_time, mac_on, key,
                 use_mxu_shift=None):
        assert solver_cfg.dim == 2, "only the 2D branch is implemented"
        self.solver = solver_cfg
        self.source = source
        self.source_time = float(source_time)
        self.mac_on = mac_on
        self.use_mxu_shift = (_default_use_mxu_shift() if use_mxu_shift is None
                              else use_mxu_shift)
        H, W = solver_cfg.res_y + 1, solver_cfg.res_x + 1
        # __init__ uses torch.zeros((2, res_y+1, res_x+1)); we add a tiny
        # deterministic perturbation so the addForce path is actually exercised.
        self.param = jnp.zeros((2, H, W), jnp.float32) + \
            0.01 * jax.random.normal(key, (2, H, W), jnp.float32)
        self.force = None
        # circulant shift matrices: pressure stencils ride the MXU (0.25 / 0.5 baked in)
        self.lane_jac, self.sub_jac, self.lane_diff = _make_stencil_mats(H, W)

    def compute_force(self):
        self.force = self.param + 0.0

    def _fscal(self, force_rescale_factor):
        return jnp.array([float(force_rescale_factor), self.solver.dt,
                          self.solver.buoyancy], dtype=jnp.float32)

    def _run(self, gate, density, vel, force_rescale_factor):
        return fluid_steps(gate, self._fscal(force_rescale_factor), self.source,
                           self.force, density, vel,
                           self.lane_jac, self.sub_jac, self.lane_diff,
                           use_mxu_shift=self.use_mxu_shift)

    def forward(self, density, vel, t, force_rescale_factor=1.0):
        """Single step — same semantics as Model.forward."""
        gate = (jnp.asarray([t], jnp.float32) < self.source_time).astype(jnp.int32)
        return self._run(gate, density, vel, force_rescale_factor)

    def rollout(self, density, vel, t0, n_steps, force_rescale_factor=1.0):
        """n_steps fused forward() calls in ONE pallas_call (t advances by 1/step);
        density/vel stay resident in VMEM between steps."""
        t_sched = float(t0) + jnp.arange(n_steps, dtype=jnp.float32)
        gate = (t_sched < self.source_time).astype(jnp.int32)
        return self._run(gate, density, vel, force_rescale_factor)


if __name__ == "__main__":
    key = jax.random.PRNGKey(0)
    k_src, k_den, k_vel, k_par = jax.random.split(key, 4)

    cfg = SolverConfig()
    H, W = cfg.res_y + 1, cfg.res_x + 1   # 64 x 128

    source = (jax.random.uniform(k_src, (1, H, W)) > 0.97).astype(jnp.float32)
    density = jax.random.uniform(k_den, (1, H, W), jnp.float32)
    vel = 0.1 * jax.random.normal(k_vel, (2, H, W), jnp.float32)

    model = StaticForceField(cfg, source, source_time=5.0, mac_on=False, key=k_par)
    model.compute_force()

    # --- single forward step (module semantics) ------------------------------
    den1, vel1 = model.forward(density, vel, t=0.0, force_rescale_factor=1.0)
    jax.block_until_ready((den1, vel1))
    assert den1.shape == (1, H, W) and vel1.shape == (2, H, W)
    assert bool(jnp.all(jnp.isfinite(den1))) and bool(jnp.all(jnp.isfinite(vel1)))

    # --- MXU circulant path vs pure-roll (v5e) path ---------------------------
    # DEFAULT matmul precision truncates the pressure operand to bf16, so the
    # two paths agree to ~1e-3 absolute rather than bitwise.
    gate1 = jnp.array([1], dtype=jnp.int32)
    fscal = model._fscal(1.0)
    d_mxu, v_mxu = fluid_steps(gate1, fscal, source, model.force, density, vel,
                               model.lane_jac, model.sub_jac, model.lane_diff,
                               use_mxu_shift=True)
    d_roll, v_roll = fluid_steps(gate1, fscal, source, model.force, density, vel,
                                 use_mxu_shift=False)
    jax.block_until_ready((d_mxu, v_mxu, d_roll, v_roll))
    assert bool(jnp.allclose(d_roll, d_mxu, rtol=1e-2, atol=1e-3))
    assert bool(jnp.allclose(v_roll, v_mxu, rtol=1e-2, atol=1e-3))

    # --- fused 4-step rollout must match 4 chained forward() calls -----------
    d_ref, v_ref = density, vel
    for k in range(4):
        d_ref, v_ref = model.forward(d_ref, v_ref, t=float(k))
    d_4, v_4 = model.rollout(density, vel, t0=0.0, n_steps=4)
    jax.block_until_ready((d_4, v_4))
    assert bool(jnp.all(jnp.isfinite(d_4))) and bool(jnp.all(jnp.isfinite(v_4)))
    assert bool(jnp.allclose(d_4, d_ref, rtol=1e-3, atol=1e-4))
    assert bool(jnp.allclose(v_4, v_ref, rtol=1e-3, atol=1e-4))

    print("KERNEL_OK")
</pallas_src>

<mosaic_0001>
module attributes {stable_mosaic.version = 11 : i64} {
  func.func @body(%arg0: memref<1xi32, #tpu.memory_space<smem>>, %arg1: memref<3xf32, #tpu.memory_space<smem>>, %arg2: memref<1x64x128xf32, #tpu.memory_space<vmem>>, %arg3: memref<2x64x128xf32, #tpu.memory_space<vmem>>, %arg4: memref<128x128xf32, #tpu.memory_space<vmem>>, %arg5: memref<64x64xf32, #tpu.memory_space<vmem>>, %arg6: memref<128x128xf32, #tpu.memory_space<vmem>>, %arg7: memref<1x64x128xf32, #tpu.memory_space<vmem>>, %arg8: memref<2x64x128xf32, #tpu.memory_space<vmem>>, %arg9: memref<1x64x128xf32, #tpu.memory_space<vmem>>, %arg10: memref<2x64x128xf32, #tpu.memory_space<vmem>>) attributes {dimension_semantics = [], scalar_prefetch = 0 : i64, scratch_operands = 0 : i64, tpu.core_type = #tpu.core_type<tc>} {
    %c0 = arith.constant 0 : index
    %0 = memref.load %arg1[%c0] : memref<3xf32, #tpu.memory_space<smem>>
    %c1 = arith.constant 1 : index
    %1 = memref.load %arg1[%c1] : memref<3xf32, #tpu.memory_space<smem>>
    %c2 = arith.constant 2 : index
    %2 = memref.load %arg1[%c2] : memref<3xf32, #tpu.memory_space<smem>>
    %c0_0 = arith.constant 0 : index
    %c0_1 = arith.constant 0 : index
    %c0_2 = arith.constant 0 : index
    %3 = vector.load %arg7[%c0_0, %c0_1, %c0_2] : memref<1x64x128xf32, #tpu.memory_space<vmem>>, vector<1x64x128xf32>
    %c0_3 = arith.constant 0 : index
    %c0_4 = arith.constant 0 : index
    %c0_5 = arith.constant 0 : index
    %4 = vector.load %arg9[%c0_3, %c0_4, %c0_5] : memref<1x64x128xf32, #tpu.memory_space<vmem>>, vector<1x64x128xf32>
    tpu.vector_store %arg9[%c0_3, %c0_4, %c0_5], %3 {strides = array<i32>} : memref<1x64x128xf32, #tpu.memory_space<vmem>>, vector<1x64x128xf32>,
    %c0_6 = arith.constant 0 : index
    %c0_7 = arith.constant 0 : index
    %c0_8 = arith.constant 0 : index
    %5 = vector.load %arg8[%c0_6, %c0_7, %c0_8] : memref<2x64x128xf32, #tpu.memory_space<vmem>>, vector<2x64x128xf32>
    %c0_9 = arith.constant 0 : index
    %c0_10 = arith.constant 0 : index
    %c0_11 = arith.constant 0 : index
    %6 = vector.load %arg10[%c0_9, %c0_10, %c0_11] : memref<2x64x128xf32, #tpu.memory_space<vmem>>, vector<2x64x128xf32>
    tpu.vector_store %arg10[%c0_9, %c0_10, %c0_11], %5 {strides = array<i32>} : memref<2x64x128xf32, #tpu.memory_space<vmem>>, vector<2x64x128xf32>,
    %c0_i32 = arith.constant 0 : i32
    %c1_i32 = arith.constant 1 : i32
    %7 = arith.muli %c0_i32, %c1_i32 : i32
    %c0_i32_12 = arith.constant 0 : i32
    %8 = arith.addi %c0_i32_12, %7 : i32
    %c0_13 = arith.constant 0 : index
    %c0_14 = arith.constant 0 : index
    %c0_15 = arith.constant 0 : index
    %9 = vector.load %arg10[%c0_13, %c0_14, %c0_15] : memref<2x64x128xf32, #tpu.memory_space<vmem>>, vector<1x64x128xf32>
    %10 = vector.shape_cast %9 : vector<1x64x128xf32> to vector<64x128xf32>
    %c1_16 = arith.constant 1 : index
    %c0_17 = arith.constant 0 : index
    %c0_18 = arith.constant 0 : index
    %11 = vector.load %arg10[%c1_16, %c0_17, %c0_18] : memref<2x64x128xf32, #tpu.memory_space<vmem>>, vector<1x64x128xf32>
    %12 = vector.shape_cast %11 : vector<1x64x128xf32> to vector<64x128xf32>
    %13 = arith.index_cast %8 : i32 to index
    %14 = memref.load %arg0[%13] : memref<1xi32, #tpu.memory_space<smem>>
    %c0_i32_19 = arith.constant 0 : i32
    %15 = arith.cmpi ne, %14, %c0_i32_19 : i32
    %16 = arith.extui %15 : i1 to i32
    %c0_i32_20 = arith.constant 0 : i32
    %17 = arith.cmpi ne, %16, %c0_i32_20 : i32
    scf.if %17 {
      %c0_75 = arith.constant 0 : index
      %c0_76 = arith.constant 0 : index
      %c0_77 = arith.constant 0 : index
      %134 = vector.load %arg9[%c0_75, %c0_76, %c0_77] : memref<1x64x128xf32, #tpu.memory_space<vmem>>, vector<1x64x128xf32>
      %135 = vector.shape_cast %134 : vector<1x64x128xf32> to vector<64x128xf32>
      %c0_78 = arith.constant 0 : index
      %c0_79 = arith.constant 0 : index
      %c0_80 = arith.constant 0 : index
      %136 = vector.load %arg2[%c0_78, %c0_79, %c0_80] : memref<1x64x128xf32, #tpu.memory_space<vmem>>, vector<1x64x128xf32>
      %137 = vector.shape_cast %136 : vector<1x64x128xf32> to vector<64x128xf32>
      %138 = arith.addf %135, %137 : vector<64x128xf32>
      %c0_81 = arith.constant 0 : index
      %c0_82 = arith.constant 0 : index
      %c0_83 = arith.constant 0 : index
      %139 = vector.load %arg9[%c0_81, %c0_82, %c0_83] : memref<1x64x128xf32, #tpu.memory_space<vmem>>, vector<1x64x128xf32>
      %140 = vector.shape_cast %139 : vector<1x64x128xf32> to vector<64x128xf32>
      %141 = vector.shape_cast %138 : vector<64x128xf32> to vector<1x64x128xf32>
      tpu.vector_store %arg9[%c0_81, %c0_82, %c0_83], %141 {strides = array<i32>} : memref<1x64x128xf32, #tpu.memory_space<vmem>>, vector<1x64x128xf32>,
    } else {
    }
    %c0_21 = arith.constant 0 : index
    %c0_22 = arith.constant 0 : index
    %c0_23 = arith.constant 0 : index
    %18 = vector.load %arg9[%c0_21, %c0_22, %c0_23] : memref<1x64x128xf32, #tpu.memory_space<vmem>>, vector<1x64x128xf32>
    %19 = vector.shape_cast %18 : vector<1x64x128xf32> to vector<64x128xf32>
    %cst = arith.constant 0.000000e+00 : f32
    %20 = vector.broadcast %cst : f32 to vector<64x128xf32>
    %21 = arith.cmpf ogt, %10, %20 : vector<64x128xf32>
    %cst_24 = arith.constant 0.000000e+00 : f32
    %22 = vector.broadcast %cst_24 : f32 to vector<64x128xf32>
    %23 = arith.cmpf ogt, %12, %22 : vector<64x128xf32>
    %24 = tpu.concatenate %19, %10, %12 in 0 : vector<64x128xf32>, vector<64x128xf32>, vector<64x128xf32> -> vector<192x128xf32>
    %c1_i32_25 = arith.constant 1 : i32
    %25 = tpu.dynamic_rotate %24 by %c1_i32_25 dim 1 : vector<192x128xf32>, i32 -> vector<192x128xf32>
    %c127_i32 = arith.constant 127 : i32
    %26 = tpu.dynamic_rotate %24 by %c127_i32 dim 1 : vector<192x128xf32>, i32 -> vector<192x128xf32>
    %27 = vector.extract_strided_slice %25 {offsets = [0, 0], sizes = [64, 128], strides = [1, 1]} : vector<192x128xf32> to vector<64x128xf32>
    %28 = vector.extract_strided_slice %26 {offsets = [0, 0], sizes = [64, 128], strides = [1, 1]} : vector<192x128xf32> to vector<64x128xf32>
    %29 = arith.subf %19, %27 : vector<64x128xf32>
    %30 = arith.subf %28, %19 : vector<64x128xf32>
    %31 = arith.select %21, %29, %30 : vector<64x128xi1>, vector<64x128xf32>
    %c1_i32_26 = arith.constant 1 : i32
    %32 = tpu.dynamic_rotate %19 by %c1_i32_26 dim 0 : vector<64x128xf32>, i32 -> vector<64x128xf32>
    %33 = arith.subf %19, %32 : vector<64x128xf32>
    %c63_i32 = arith.constant 63 : i32
    %34 = tpu.dynamic_rotate %19 by %c63_i32 dim 0 : vector<64x128xf32>, i32 -> vector<64x128xf32>
    %35 = arith.subf %34, %19 : vector<64x128xf32>
    %36 = arith.select %23, %33, %35 : vector<64x128xi1>, vector<64x128xf32>
    %37 = arith.mulf %10, %31 : vector<64x128xf32>
    %38 = arith.mulf %12, %36 : vector<64x128xf32>
    %39 = arith.addf %37, %38 : vector<64x128xf32>
    %40 = vector.broadcast %1 : f32 to vector<64x128xf32>
    %41 = arith.mulf %40, %39 : vector<64x128xf32>
    %42 = arith.subf %19, %41 : vector<64x128xf32>
    %43 = vector.extract_strided_slice %25 {offsets = [64, 0], sizes = [64, 128], strides = [1, 1]} : vector<192x128xf32> to vector<64x128xf32>
    %44 = vector.extract_strided_slice %26 {offsets = [64, 0], sizes = [64, 128], strides = [1, 1]} : vector<192x128xf32> to vector<64x128xf32>
    %45 = arith.subf %10, %43 : vector<64x128xf32>
    %46 = arith.subf %44, %10 : vector<64x128xf32>
    %47 = arith.select %21, %45, %46 : vector<64x128xi1>, vector<64x128xf32>
    %c1_i32_27 = arith.constant 1 : i32
    %48 = tpu.dynamic_rotate %10 by %c1_i32_27 dim 0 : vector<64x128xf32>, i32 -> vector<64x128xf32>
    %49 = arith.subf %10, %48 : vector<64x128xf32>
    %c63_i32_28 = arith.constant 63 : i32
    %50 = tpu.dynamic_rotate %10 by %c63_i32_28 dim 0 : vector<64x128xf32>, i32 -> vector<64x128xf32>
    %51 = arith.subf %50, %10 : vector<64x128xf32>
    %52 = arith.select %23, %49, %51 : vector<64x128xi1>, vector<64x128xf32>
    %53 = arith.mulf %10, %47 : vector<64x128xf32>
    %54 = arith.mulf %12, %52 : vector<64x128xf32>
    %55 = arith.addf %53, %54 : vector<64x128xf32>
    %56 = vector.broadcast %1 : f32 to vector<64x128xf32>
    %57 = arith.mulf %56, %55 : vector<64x128xf32>
    %58 = arith.subf %10, %57 : vector<64x128xf32>
    %59 = vector.extract_strided_slice %25 {offsets = [128, 0], sizes = [64, 128], strides = [1, 1]} : vector<192x128xf32> to vector<64x128xf32>
    %60 = vector.extract_strided_slice %26 {offsets = [128, 0], sizes = [64, 128], strides = [1, 1]} : vector<192x128xf32> to vector<64x128xf32>
    %61 = arith.subf %12, %59 : vector<64x128xf32>
    %62 = arith.subf %60, %12 : vector<64x128xf32>
    %63 = arith.select %21, %61, %62 : vector<64x128xi1>, vector<64x128xf32>
    %c1_i32_29 = arith.constant 1 : i32
    %64 = tpu.dynamic_rotate %12 by %c1_i32_29 dim 0 : vector<64x128xf32>, i32 -> vector<64x128xf32>
    %65 = arith.subf %12, %64 : vector<64x128xf32>
    %c63_i32_30 = arith.constant 63 : i32
    %66 = tpu.dynamic_rotate %12 by %c63_i32_30 dim 0 : vector<64x128xf32>, i32 -> vector<64x128xf32>
    %67 = arith.subf %66, %12 : vector<64x128xf32>
    %68 = arith.select %23, %65, %67 : vector<64x128xi1>, vector<64x128xf32>
    %69 = arith.mulf %10, %63 : vector<64x128xf32>
    %70 = arith.mulf %12, %68 : vector<64x128xf32>
    %71 = arith.addf %69, %70 : vector<64x128xf32>
    %72 = vector.broadcast %1 : f32 to vector<64x128xf32>
    %73 = arith.mulf %72, %71 : vector<64x128xf32>
    %74 = arith.subf %12, %73 : vector<64x128xf32>
    %c0_31 = arith.constant 0 : index
    %c0_32 = arith.constant 0 : index
    %c0_33 = arith.constant 0 : index
    %75 = vector.load %arg9[%c0_31, %c0_32, %c0_33] : memref<1x64x128xf32, #tpu.memory_space<vmem>>, vector<1x64x128xf32>
    %76 = vector.shape_cast %75 : vector<1x64x128xf32> to vector<64x128xf32>
    %77 = vector.shape_cast %42 : vector<64x128xf32> to vector<1x64x128xf32>
    tpu.vector_store %arg9[%c0_31, %c0_32, %c0_33], %77 {strides = array<i32>} : memref<1x64x128xf32, #tpu.memory_space<vmem>>, vector<1x64x128xf32>,
    %78 = arith.mulf %1, %2 : f32
    %79 = vector.broadcast %78 : f32 to vector<64x128xf32>
    %80 = arith.mulf %79, %42 : vector<64x128xf32>
    %81 = arith.addf %74, %80 : vector<64x128xf32>
    %c1_34 = arith.constant 1 : index
    %c0_35 = arith.constant 0 : index
    %c0_36 = arith.constant 0 : index
    %82 = vector.load %arg3[%c1_34, %c0_35, %c0_36] : memref<2x64x128xf32, #tpu.memory_space<vmem>>, vector<1x64x128xf32>
    %83 = vector.shape_cast %82 : vector<1x64x128xf32> to vector<64x128xf32>
    %84 = vector.broadcast %0 : f32 to vector<64x128xf32>
    %85 = arith.mulf %83, %84 : vector<64x128xf32>
    %86 = vector.broadcast %1 : f32 to vector<64x128xf32>
    %87 = arith.mulf %86, %85 : vector<64x128xf32>
    %88 = arith.addf %81, %87 : vector<64x128xf32>
    %c0_37 = arith.constant 0 : index
    %c0_38 = arith.constant 0 : index
    %c0_39 = arith.constant 0 : index
    %89 = vector.load %arg3[%c0_37, %c0_38, %c0_39] : memref<2x64x128xf32, #tpu.memory_space<vmem>>, vector<1x64x128xf32>
    %90 = vector.shape_cast %89 : vector<1x64x128xf32> to vector<64x128xf32>
    %91 = vector.broadcast %0 : f32 to vector<64x128xf32>
    %92 = arith.mulf %90, %91 : vector<64x128xf32>
    %93 = vector.broadcast %1 : f32 to vector<64x128xf32>
    %94 = arith.mulf %93, %92 : vector<64x128xf32>
    %95 = arith.addf %58, %94 : vector<64x128xf32>
    %c0_40 = arith.constant 0 : index
    %c0_41 = arith.constant 0 : index
    %96 = vector.load %arg6[%c0_40, %c0_41] : memref<128x128xf32, #tpu.memory_space<vmem>>, vector<128x128xf32>
    %cst_42 = arith.constant dense<0.000000e+00> : vector<64x128xf32>
    %97 = tpu.matmul %95, %96, %cst_42 {dimension_numbers = #tpu.dot_dimension_numbers<[1], [0], [0], [1], [0, 0, 1, 1], [], []>} : vector<64x128xf32>, vector<128x128xf32>, vector<64x128xf32> -> vector<64x128xf32>
    %c63_i32_43 = arith.constant 63 : i32
    %98 = tpu.dynamic_rotate %88 by %c63_i32_43 dim 0 : vector<64x128xf32>, i32 -> vector<64x128xf32>
    %c1_i32_44 = arith.constant 1 : i32
    %99 = tpu.dynamic_rotate %88 by %c1_i32_44 dim 0 : vector<64x128xf32>, i32 -> vector<64x128xf32>
    %100 = arith.subf %98, %99 : vector<64x128xf32>
    %cst_45 = arith.constant 5.000000e-01 : f32
    %101 = vector.broadcast %cst_45 : f32 to vector<64x128xf32>
    %102 = arith.mulf %101, %100 : vector<64x128xf32>
    %103 = arith.addf %97, %102 : vector<64x128xf32>
    %c0_46 = arith.constant 0 : index
    %c0_47 = arith.constant 0 : index
    %c0_48 = arith.constant 0 : index
    %104 = vector.load %arg10[%c0_46, %c0_47, %c0_48] : memref<2x64x128xf32, #tpu.memory_space<vmem>>, vector<1x64x128xf32>
    %105 = vector.shape_cast %104 : vector<1x64x128xf32> to vector<64x128xf32>
    %106 = vector.shape_cast %95 : vector<64x128xf32> to vector<1x64x128xf32>
    tpu.vector_store %arg10[%c0_46, %c0_47, %c0_48], %106 {strides = array<i32>} : memref<2x64x128xf32, #tpu.memory_space<vmem>>, vector<1x64x128xf32>,
    %c1_49 = arith.constant 1 : index
    %c0_50 = arith.constant 0 : index
    %c0_51 = arith.constant 0 : index
    %107 = vector.load %arg10[%c1_49, %c0_50, %c0_51] : memref<2x64x128xf32, #tpu.memory_space<vmem>>, vector<1x64x128xf32>
    %108 = vector.shape_cast %107 : vector<1x64x128xf32> to vector<64x128xf32>
    %109 = vector.shape_cast %88 : vector<64x128xf32> to vector<1x64x128xf32>
    tpu.vector_store %arg10[%c1_49, %c0_50, %c0_51], %109 {strides = array<i32>} : memref<2x64x128xf32, #tpu.memory_space<vmem>>, vector<1x64x128xf32>,
    %cst_52 = arith.constant 2.500000e-01 : f32
    %110 = vector.broadcast %cst_52 : f32 to vector<64x128xf32>
    %111 = arith.mulf %110, %103 : vector<64x128xf32>
    %cst_53 = arith.constant 0.000000e+00 : f32
    %112 = vector.broadcast %cst_53 : f32 to vector<64x128xf32>
    %c0_i32_54 = arith.constant 0 : i32
    %c5_i32 = arith.constant 5 : i32
    %113 = arith.addi %c0_i32_54, %c5_i32 : i32
    %c1_i32_55 = arith.constant 1 : i32
    %114 = scf.for %arg11 = %c0_i32_54 to %113 step %c1_i32_55 iter_args(%arg12 = %112) -> (vector<64x128xf32>)  : i32 {
      %c0_75 = arith.constant 0 : index
      %c0_76 = arith.constant 0 : index
      %134 = vector.load %arg4[%c0_75, %c0_76] : memref<128x128xf32, #tpu.memory_space<vmem>>, vector<128x128xf32>
      %cst_77 = arith.constant dense<0.000000e+00> : vector<64x128xf32>
      %135 = tpu.matmul %arg12, %134, %cst_77 {dimension_numbers = #tpu.dot_dimension_numbers<[1], [0], [0], [1], [0, 0, 1, 1], [], []>} : vector<64x128xf32>, vector<128x128xf32>, vector<64x128xf32> -> vector<64x128xf32>
      %c0_78 = arith.constant 0 : index
      %c0_79 = arith.constant 0 : index
      %136 = vector.load %arg5[%c0_78, %c0_79] : memref<64x64xf32, #tpu.memory_space<vmem>>, vector<64x64xf32>
      %cst_80 = arith.constant dense<0.000000e+00> : vector<64x128xf32>
      %137 = tpu.matmul %136, %arg12, %cst_80 {dimension_numbers = #tpu.dot_dimension_numbers<[1], [0], [0], [1], [0, 0, 1, 1], [], []>} : vector<64x64xf32>, vector<64x128xf32>, vector<64x128xf32> -> vector<64x128xf32>
      %138 = arith.addf %135, %137 : vector<64x128xf32>
      %139 = arith.subf %138, %111 : vector<64x128xf32>
      %c0_81 = arith.constant 0 : index
      %c0_82 = arith.constant 0 : index
      %140 = vector.load %arg4[%c0_81, %c0_82] : memref<128x128xf32, #tpu.memory_space<vmem>>, vector<128x128xf32>
      %cst_83 = arith.constant dense<0.000000e+00> : vector<64x128xf32>
      %141 = tpu.matmul %139, %140, %cst_83 {dimension_numbers = #tpu.dot_dimension_numbers<[1], [0], [0], [1], [0, 0, 1, 1], [], []>} : vector<64x128xf32>, vector<128x128xf32>, vector<64x128xf32> -> vector<64x128xf32>
      %c0_84 = arith.constant 0 : index
      %c0_85 = arith.constant 0 : index
      %142 = vector.load %arg5[%c0_84, %c0_85] : memref<64x64xf32, #tpu.memory_space<vmem>>, vector<64x64xf32>
      %cst_86 = arith.constant dense<0.000000e+00> : vector<64x128xf32>
      %143 = tpu.matmul %142, %139, %cst_86 {dimension_numbers = #tpu.dot_dimension_numbers<[1], [0], [0], [1], [0, 0, 1, 1], [], []>} : vector<64x64xf32>, vector<64x128xf32>, vector<64x128xf32> -> vector<64x128xf32>
      %144 = arith.addf %141, %143 : vector<64x128xf32>
      %145 = arith.subf %144, %111 : vector<64x128xf32>
      %c0_87 = arith.constant 0 : index
      %c0_88 = arith.constant 0 : index
      %146 = vector.load %arg4[%c0_87, %c0_88] : memref<128x128xf32, #tpu.memory_space<vmem>>, vector<128x128xf32>
      %cst_89 = arith.constant dense<0.000000e+00> : vector<64x128xf32>
      %147 = tpu.matmul %145, %146, %cst_89 {dimension_numbers = #tpu.dot_dimension_numbers<[1], [0], [0], [1], [0, 0, 1, 1], [], []>} : vector<64x128xf32>, vector<128x128xf32>, vector<64x128xf32> -> vector<64x128xf32>
      %c0_90 = arith.constant 0 : index
      %c0_91 = arith.constant 0 : index
      %148 = vector.load %arg5[%c0_90, %c0_91] : memref<64x64xf32, #tpu.memory_space<vmem>>, vector<64x64xf32>
      %cst_92 = arith.constant dense<0.000000e+00> : vector<64x128xf32>
      %149 = tpu.matmul %148, %145, %cst_92 {dimension_numbers = #tpu.dot_dimension_numbers<[1], [0], [0], [1], [0, 0, 1, 1], [], []>} : vector<64x64xf32>, vector<64x128xf32>, vector<64x128xf32> -> vector<64x128xf32>
      %150 = arith.addf %147, %149 : vector<64x128xf32>
      %151 = arith.subf %150, %111 : vector<64x128xf32>
      %c0_93 = arith.constant 0 : index
      %c0_94 = arith.constant 0 : index
      %152 = vector.load %arg4[%c0_93, %c0_94] : memref<128x128xf32, #tpu.memory_space<vmem>>, vector<128x128xf32>
      %cst_95 = arith.constant dense<0.000000e+00> : vector<64x128xf32>
      %153 = tpu.matmul %151, %152, %cst_95 {dimension_numbers = #tpu.dot_dimension_numbers<[1], [0], [0], [1], [0, 0, 1, 1], [], []>} : vector<64x128xf32>, vector<128x128xf32>, vector<64x128xf32> -> vector<64x128xf32>
      %c0_96 = arith.constant 0 : index
      %c0_97 = arith.constant 0 : index
      %154 = vector.load %arg5[%c0_96, %c0_97] : memref<64x64xf32, #tpu.memory_space<vmem>>, vector<64x64xf32>
      %cst_98 = arith.constant dense<0.000000e+00> : vector<64x128xf32>
      %155 = tpu.matmul %154, %151, %cst_98 {dimension_numbers = #tpu.dot_dimension_numbers<[1], [0], [0], [1], [0, 0, 1, 1], [], []>} : vector<64x64xf32>, vector<64x128xf32>, vector<64x128xf32> -> vector<64x128xf32>
      %156 = arith.addf %153, %155 : vector<64x128xf32>
      %157 = arith.subf %156, %111 : vector<64x128xf32>
      scf.yield %157 : vector<64x128xf32>
    }
    %c0_56 = arith.constant 0 : index
    %c0_57 = arith.constant 0 : index
    %c0_58 = arith.constant 0 : index
    %115 = vector.load %arg10[%c0_56, %c0_57, %c0_58] : memref<2x64x128xf32, #tpu.memory_space<vmem>>, vector<1x64x128xf32>
    %116 = vector.shape_cast %115 : vector<1x64x128xf32> to vector<64x128xf32>
    %c0_59 = arith.constant 0 : index
    %c0_60 = arith.constant 0 : index
    %117 = vector.load %arg6[%c0_59, %c0_60] : memref<128x128xf32, #tpu.memory_space<vmem>>, vector<128x128xf32>
    %cst_61 = arith.constant dense<0.000000e+00> : vector<64x128xf32>
    %118 = tpu.matmul %114, %117, %cst_61 {dimension_numbers = #tpu.dot_dimension_numbers<[1], [0], [0], [1], [0, 0, 1, 1], [], []>} : vector<64x128xf32>, vector<128x128xf32>, vector<64x128xf32> -> vector<64x128xf32>
    %119 = arith.subf %116, %118 : vector<64x128xf32>
    %c1_62 = arith.constant 1 : index
    %c0_63 = arith.constant 0 : index
    %c0_64 = arith.constant 0 : index
    %120 = vector.load %arg10[%c1_62, %c0_63, %c0_64] : memref<2x64x128xf32, #tpu.memory_space<vmem>>, vector<1x64x128xf32>
    %121 = vector.shape_cast %120 : vector<1x64x128xf32> to vector<64x128xf32>
    %c63_i32_65 = arith.constant 63 : i32
    %122 = tpu.dynamic_rotate %114 by %c63_i32_65 dim 0 : vector<64x128xf32>, i32 -> vector<64x128xf32>
    %c1_i32_66 = arith.constant 1 : i32
    %123 = tpu.dynamic_rotate %114 by %c1_i32_66 dim 0 : vector<64x128xf32>, i32 -> vector<64x128xf32>
    %124 = arith.subf %122, %123 : vector<64x128xf32>
    %cst_67 = arith.constant 5.000000e-01 : f32
    %125 = vector.broadcast %cst_67 : f32 to vector<64x128xf32>
    %126 = arith.mulf %125, %124 : vector<64x128xf32>
    %127 = arith.subf %121, %126 : vector<64x128xf32>
    %c0_68 = arith.constant 0 : index
    %c0_69 = arith.constant 0 : index
    %c0_70 = arith.constant 0 : index
    %128 = vector.load %arg10[%c0_68, %c0_69, %c0_70] : memref<2x64x128xf32, #tpu.memory_space<vmem>>, vector<1x64x128xf32>
    %129 = vector.shape_cast %128 : vector<1x64x128xf32> to vector<64x128xf32>
    %130 = vector.shape_cast %119 : vector<64x128xf32> to vector<1x64x128xf32>
    tpu.vector_store %arg10[%c0_68, %c0_69, %c0_70], %130 {strides = array<i32>} : memref<2x64x128xf32, #tpu.memory_space<vmem>>, vector<1x64x128xf32>,
    %c1_71 = arith.constant 1 : index
    %c0_72 = arith.constant 0 : index
    %c0_73 = arith.constant 0 : index
    %131 = vector.load %arg10[%c1_71, %c0_72, %c0_73] : memref<2x64x128xf32, #tpu.memory_space<vmem>>, vector<1x64x128xf32>
    %132 = vector.shape_cast %131 : vector<1x64x128xf32> to vector<64x128xf32>
    %133 = vector.shape_cast %127 : vector<64x128xf32> to vector<1x64x128xf32>
    tpu.vector_store %arg10[%c1_71, %c0_72, %c0_73], %133 {strides = array<i32>} : memref<2x64x128xf32, #tpu.memory_space<vmem>>, vector<1x64x128xf32>,
    %c1_i32_74 = arith.constant 1 : i32
    return
  }
}

</mosaic_0001>

<llo_original>
// kernel: fluid_steps.1
$region0: #{fluid_steps.1}
  #allocation0 [shape = 'u32[]', space=smem, size = 0x4, offset = 0x4, fixed_abs, tag = 'smem constant byte address 0x4 - core index']
  #allocation1 [shape = 'u32[72,128]{1,0:T(1,128)}', space=vmem, size = 0x9000, scoped, tag = 'internal scratch']
  #allocation2 [shape = 's32[1]{0:T(128)S(6)}', space=smem, size = 0x200, scoped, tag = 'scoped memory for fluid_steps.1']
  %s0 = inlined_call_operand.<no memory space> [shape: s32[1], index: 0, kind: input, shape index: {}]
  %s1 = inlined_call_operand.vmem [shape: f32[3], index: 1, kind: input, shape index: {}]
  %s2 = inlined_call_operand.vmem [shape: f32[1,64,128], index: 2, kind: input, shape index: {}]
  %s3 = inlined_call_operand.vmem [shape: f32[2,64,128], index: 3, kind: input, shape index: {}]
  %s4 = inlined_call_operand.vmem [shape: f32[128,128], index: 4, kind: input, shape index: {}]
  %s5 = inlined_call_operand.hbm [shape: f32[64,64], index: 5, kind: input, shape index: {}]
  %s6 = inlined_call_operand.hbm [shape: f32[128,128], index: 6, kind: input, shape index: {}]
  %s7 = inlined_call_operand.hbm [shape: f32[1,64,128], index: 7, kind: input, shape index: {}, may-alias: {7,9}]
  %s8 = inlined_call_operand.hbm [shape: f32[2,64,128], index: 8, kind: input, shape index: {}, may-alias: {8,10}]
  %s9 = inlined_call_operand.hbm [shape: f32[1,64,128], index: 9, kind: output, shape index: {0}, may-alias: {7,9}]
  %s10 = inlined_call_operand.hbm [shape: f32[2,64,128], index: 10, kind: output, shape index: {1}, may-alias: {8,10}]
  %11 = xla_tuple %s9, %s10
  %s12 = sld [smem:[#allocation0]]
  $region85: #{fluid_steps.1} parent=0
    _
  %s14 = ssub.s32 1, %s12
  %s15 = scalar_select 0, %s14, %s12
  %16 = sst [smem:[#allocation2]] %s0
  $region1: #{fluid_steps.1} parent=0
    #allocation3 [shape = 'u8[512]{0}', space=smem, size = 0x200, scoped, tag = 'input window, operand 1, single buffered']
    #allocation4 [shape = 's32[1]{0}', space=sflag, size = 0x4, scoped, tag = 'scoped memory for fluid_steps.1']
    #allocation5 [shape = 's32[1]{0}', space=sflag, size = 0x4, scoped, tag = 'scoped memory for fluid_steps.1']
    #allocation6 [shape = 's32[1]{0}', space=sflag, size = 0x4, scoped, tag = 'scoped memory for fluid_steps.1']
    #allocation7 [shape = 'u8[32768]{0}', space=vmem, size = 0x8000, scoped, tag = 'input window, operand 5, single buffered']
    #allocation8 [shape = 'u8[65536]{0}', space=vmem, size = 0x10000, scoped, tag = 'input window, operand 6, single buffered']
    #allocation9 [shape = 's32[1]{0}', space=sflag, size = 0x4, scoped, tag = 'scoped memory for fluid_steps.1']
    #allocation10 [shape = 'u8[32768]{0}', space=vmem, size = 0x8000, scoped, tag = 'input window, operand 7, single buffered']
    #allocation11 [shape = 'u8[65536]{0}', space=vmem, size = 0x10000, scoped, tag = 'input window, operand 8, single buffered']
    #allocation12 [shape = 's32[1]{0}', space=sflag, size = 0x4, scoped, tag = 'scoped memory for fluid_steps.1']
    #allocation13 [shape = 'u8[32768]{0}', space=vmem, size = 0x8000, scoped, tag = 'output window, operand 0, single buffered']
    #allocation14 [shape = 'u8[65536]{0}', space=vmem, size = 0x10000, scoped, tag = 'output window, operand 1, single buffered']
    #allocation15 [shape = 's32[1]{0}', space=sflag, size = 0x4, scoped, tag = 'scoped memory for fluid_steps.1']
    %17 = vsyncpa [#allocation6], 0
    %18 = vsyncpa [#allocation4], 0
    %19 = vsyncpa [#allocation9], 0
    %20 = vsyncpa [#allocation12], 0
    %21 = vsyncpa [#allocation5], 0
    %22 = vsyncpa [#allocation15], 0
    // Predicated region
    $region2: #{fluid_steps.1} parent=1 // pred_check
      _
    $region3: #{fluid_steps.1} parent=1 // pred_check_branch
      %24 = sbr.rel (0) target = $region5
    $region4: #{fluid_steps.1} parent=1 // pred_region
      _
    $region5: #{fluid_steps.1} parent=1 // pred_fallthru
      _
    // Predicated region
    $region6: #{fluid_steps.1} parent=1 // pred_check
      _
    $region7: #{fluid_steps.1} parent=1 // pred_check_branch
      %26 = sbr.rel (0) target = $region9
    $region8: #{fluid_steps.1} parent=1 // pred_region
      %28 = vsyncadd [#allocation6], 0
      %s30 = sshll.u32 %s1, 4
      %s31 = int_to_ptr.vmem [resolvable:$true] %s30
      %33 = dma.vmem_to_smem %s31, 16, [#allocation3], [#allocation6]
    $region9: #{fluid_steps.1} parent=1 // pred_fallthru
      _
    // Predicated region
    $region10: #{fluid_steps.1} parent=1 // pred_check
      _
    $region11: #{fluid_steps.1} parent=1 // pred_check_branch
      %35 = sbr.rel (0) target = $region13
    $region12: #{fluid_steps.1} parent=1 // pred_region
      _
    $region13: #{fluid_steps.1} parent=1 // pred_fallthru
      _
    // Predicated region
    $region14: #{fluid_steps.1} parent=1 // pred_check
      _
    $region15: #{fluid_steps.1} parent=1 // pred_check_branch
      %37 = sbr.rel (0) target = $region17
    $region16: #{fluid_steps.1} parent=1 // pred_region
      _
    $region17: #{fluid_steps.1} parent=1 // pred_fallthru
      _
    // Predicated region
    $region18: #{fluid_steps.1} parent=1 // pred_check
      _
    $region19: #{fluid_steps.1} parent=1 // pred_check_branch
      %39 = sbr.rel (0) target = $region21
    $region20: #{fluid_steps.1} parent=1 // pred_region
      _
    $region21: #{fluid_steps.1} parent=1 // pred_fallthru
      _
    // Predicated region
    $region22: #{fluid_steps.1} parent=1 // pred_check
      _
    $region23: #{fluid_steps.1} parent=1 // pred_check_branch
      %41 = sbr.rel (0) target = $region25
    $region24: #{fluid_steps.1} parent=1 // pred_region
      %43 = vsyncadd [#allocation4], 0
      %s44 = sshll.u32 %s5, 4
      %s45 = int_to_ptr.hbm [resolvable:$true] %s44
      %s46 = sshll.u32 [#allocation7], 4
      %s47 = int_to_ptr.vmem [resolvable:$true] %s46
      %52 = dma.hbm_to_vmem [thread:$0]  %s45, 1024, %s47, [#allocation4], 128, 128, 8
    $region25: #{fluid_steps.1} parent=1 // pred_fallthru
      _
    // Predicated region
    $region26: #{fluid_steps.1} parent=1 // pred_check
      _
    $region27: #{fluid_steps.1} parent=1 // pred_check_branch
      %54 = sbr.rel (0) target = $region29
    $region28: #{fluid_steps.1} parent=1 // pred_region
      %56 = vsyncadd [#allocation9], 0
      %s57 = sshll.u32 %s6, 4
      %s58 = int_to_ptr.hbm [resolvable:$true] %s57
      %s59 = sshll.u32 [#allocation8], 4
      %s60 = int_to_ptr.vmem [resolvable:$true] %s59
      %65 = dma.hbm_to_vmem [thread:$0]  %s58, 2048, %s60, [#allocation9], 128, 128, 8
    $region29: #{fluid_steps.1} parent=1 // pred_fallthru
      _
    // Predicated region
    $region30: #{fluid_steps.1} parent=1 // pred_check
      _
    $region31: #{fluid_steps.1} parent=1 // pred_check_branch
      %67 = sbr.rel (0) target = $region33
    $region32: #{fluid_steps.1} parent=1 // pred_region
      %69 = vsyncadd [#allocation9], 0
      %s70 = sshll.u32 %s7, 4
      %s71 = int_to_ptr.hbm [resolvable:$true] %s70
      %s72 = sshll.u32 [#allocation10], 4
      %s73 = int_to_ptr.vmem [resolvable:$true] %s72
      %78 = dma.hbm_to_vmem [thread:$0]  %s71, 1024, %s73, [#allocation9], 128, 128, 8
    $region33: #{fluid_steps.1} parent=1 // pred_fallthru
      _
    // Predicated region
    $region34: #{fluid_steps.1} parent=1 // pred_check
      _
    $region35: #{fluid_steps.1} parent=1 // pred_check_branch
      %80 = sbr.rel (0) target = $region37
    $region36: #{fluid_steps.1} parent=1 // pred_region
      %82 = vsyncadd [#allocation12], 0
      %s83 = sshll.u32 %s8, 4
      %s84 = int_to_ptr.hbm [resolvable:$true] %s83
      %s85 = sshll.u32 [#allocation11], 4
      %s86 = int_to_ptr.vmem [resolvable:$true] %s85
      %91 = dma.hbm_to_vmem [thread:$0]  %s84, 2048, %s86, [#allocation12], 128, 128, 8
    $region37: #{fluid_steps.1} parent=1 // pred_fallthru
      _
    // Predicated region
    $region38: #{fluid_steps.1} parent=1 // pred_check
      _
    $region39: #{fluid_steps.1} parent=1 // pred_check_branch
      %93 = sbr.rel (0) target = $region41
    $region40: #{fluid_steps.1} parent=1 // pred_region
      %95 = dma.done [#allocation6], 16
    $region41: #{fluid_steps.1} parent=1 // pred_fallthru
      _
    // Predicated region
    $region42: #{fluid_steps.1} parent=1 // pred_check
      _
    $region43: #{fluid_steps.1} parent=1 // pred_check_branch
      %97 = sbr.rel (0) target = $region45
    $region44: #{fluid_steps.1} parent=1 // pred_region
      %99 = dma.done [#allocation4], 1024
    $region45: #{fluid_steps.1} parent=1 // pred_fallthru
      _
    // Predicated region
    $region46: #{fluid_steps.1} parent=1 // pred_check
      _
    $region47: #{fluid_steps.1} parent=1 // pred_check_branch
      %101 = sbr.rel (0) target = $region49
    $region48: #{fluid_steps.1} parent=1 // pred_region
      %103 = dma.done [#allocation9], 2048
    $region49: #{fluid_steps.1} parent=1 // pred_fallthru
      _
    // Predicated region
    $region50: #{fluid_steps.1} parent=1 // pred_check
      _
    $region51: #{fluid_steps.1} parent=1 // pred_check_branch
      %105 = sbr.rel (0) target = $region53
    $region52: #{fluid_steps.1} parent=1 // pred_region
      %107 = dma.done [#allocation9], 1024
    $region53: #{fluid_steps.1} parent=1 // pred_fallthru
      _
    // Predicated region
    $region54: #{fluid_steps.1} parent=1 // pred_check
      _
    $region55: #{fluid_steps.1} parent=1 // pred_check_branch
      %109 = sbr.rel (0) target = $region57
    $region56: #{fluid_steps.1} parent=1 // pred_region
      %111 = dma.done [#allocation12], 2048
    $region57: #{fluid_steps.1} parent=1 // pred_fallthru
      _
    %112 = sfence
    %s113 = sld [smem:[#allocation3]]
    %s114 = sld [smem:[#allocation3 + $0x1]]
    %s115 = sld [smem:[#allocation3 + $0x2]]
    %v116 = vld [vmem:[#allocation10] sm:$0xff]
    %v117 = vld [vmem:[#allocation10 + $0x8] sm:$0xff]
    %v118 = vld [vmem:[#allocation10 + $0x10] sm:$0xff]
    %v119 = vld [vmem:[#allocation10 + $0x18] sm:$0xff]
    %v120 = vld [vmem:[#allocation10 + $0x20] sm:$0xff]
    %v121 = vld [vmem:[#allocation10 + $0x28] sm:$0xff]
    %v122 = vld [vmem:[#allocation10 + $0x30] sm:$0xff]
    %v123 = vld [vmem:[#allocation10 + $0x38] sm:$0xff]
    %124 = vst [vmem:[#allocation13] sm:$0xff] %v116
    %125 = vst [vmem:[#allocation13 + $0x8] sm:$0xff] %v117
    %126 = vst [vmem:[#allocation13 + $0x10] sm:$0xff] %v118
    %127 = vst [vmem:[#allocation13 + $0x18] sm:$0xff] %v119
    %128 = vst [vmem:[#allocation13 + $0x20] sm:$0xff] %v120
    %129 = vst [vmem:[#allocation13 + $0x28] sm:$0xff] %v121
    %130 = vst [vmem:[#allocation13 + $0x30] sm:$0xff] %v122
    %131 = vst [vmem:[#allocation13 + $0x38] sm:$0xff] %v123
    %v132 = vld [vmem:[#allocation11] sm:$0xff]
    %v133 = vld [vmem:[#allocation11 + $0x8] sm:$0xff]
    %v134 = vld [vmem:[#allocation11 + $0x10] sm:$0xff]
    %v135 = vld [vmem:[#allocation11 + $0x18] sm:$0xff]
    %v136 = vld [vmem:[#allocation11 + $0x20] sm:$0xff]
    %v137 = vld [vmem:[#allocation11 + $0x28] sm:$0xff]
    %v138 = vld [vmem:[#allocation11 + $0x30] sm:$0xff]
    %v139 = vld [vmem:[#allocation11 + $0x38] sm:$0xff]
    %v140 = vld [vmem:[#allocation11 + $0x40] sm:$0xff]
    %v141 = vld [vmem:[#allocation11 + $0x48] sm:$0xff]
    %v142 = vld [vmem:[#allocation11 + $0x50] sm:$0xff]
    %v143 = vld [vmem:[#allocation11 + $0x58] sm:$0xff]
    %v144 = vld [vmem:[#allocation11 + $0x60] sm:$0xff]
    %v145 = vld [vmem:[#allocation11 + $0x68] sm:$0xff]
    %v146 = vld [vmem:[#allocation11 + $0x70] sm:$0xff]
    %v147 = vld [vmem:[#allocation11 + $0x78] sm:$0xff]
    %148 = vst [vmem:[#allocation14] sm:$0xff] %v132
    %149 = vst [vmem:[#allocation14 + $0x8] sm:$0xff] %v133
    %150 = vst [vmem:[#allocation14 + $0x10] sm:$0xff] %v134
    %151 = vst [vmem:[#allocation14 + $0x18] sm:$0xff] %v135
    %152 = vst [vmem:[#allocation14 + $0x20] sm:$0xff] %v136
    %153 = vst [vmem:[#allocation14 + $0x28] sm:$0xff] %v137
    %154 = vst [vmem:[#allocation14 + $0x30] sm:$0xff] %v138
    %155 = vst [vmem:[#allocation14 + $0x38] sm:$0xff] %v139
    %156 = vst [vmem:[#allocation14 + $0x40] sm:$0xff] %v140
    %157 = vst [vmem:[#allocation14 + $0x48] sm:$0xff] %v141
    %158 = vst [vmem:[#allocation14 + $0x50] sm:$0xff] %v142
    %159 = vst [vmem:[#allocation14 + $0x58] sm:$0xff] %v143
    %160 = vst [vmem:[#allocation14 + $0x60] sm:$0xff] %v144
    %161 = vst [vmem:[#allocation14 + $0x68] sm:$0xff] %v145
    %162 = vst [vmem:[#allocation14 + $0x70] sm:$0xff] %v146
    %163 = vst [vmem:[#allocation14 + $0x78] sm:$0xff] %v147
    %v164 = vld [vmem:[#allocation14] sm:$0xff]
    %v165 = vld [vmem:[#allocation14 + $0x8] sm:$0xff]
    %v166 = vld [vmem:[#allocation14 + $0x10] sm:$0xff]
    %v167 = vld [vmem:[#allocation14 + $0x18] sm:$0xff]
    %v168 = vld [vmem:[#allocation14 + $0x20] sm:$0xff]
    %v169 = vld [vmem:[#allocation14 + $0x28] sm:$0xff]
    %v170 = vld [vmem:[#allocation14 + $0x30] sm:$0xff]
    %v171 = vld [vmem:[#allocation14 + $0x38] sm:$0xff]
    %s172 = scalar_lea.vmem [#allocation14], 64
    %v173 = vld [vmem:[%s172] sm:$0xff]
    %v174 = vld [vmem:[%s172 + $0x8] sm:$0xff]
    %v175 = vld [vmem:[%s172 + $0x10] sm:$0xff]
    %v176 = vld [vmem:[%s172 + $0x18] sm:$0xff]
    %v177 = vld [vmem:[%s172 + $0x20] sm:$0xff]
    %v178 = vld [vmem:[%s172 + $0x28] sm:$0xff]
    %v179 = vld [vmem:[%s172 + $0x30] sm:$0xff]
    %v180 = vld [vmem:[%s172 + $0x38] sm:$0xff]
    %s181 = sld [smem:[#allocation2]]
    %p182 = scmp.ne.s32.totalorder %s181, 0
    // Predicated region
    $region58: #{fluid_steps.1} parent=1 // pred_check
      %p183 = pneg %p182
    $region59: #{fluid_steps.1} parent=1 // pred_check_branch
      %185 = sbr.rel (%p183) target = $region61
    $region60: #{fluid_steps.1} parent=1 // pred_region
      %v186 = vld [vmem:[#allocation13] sm:$0xff]
      %v187 = vld [vmem:[#allocation13 + $0x8] sm:$0xff]
      %v188 = vld [vmem:[#allocation13 + $0x10] sm:$0xff]
      %v189 = vld [vmem:[#allocation13 + $0x18] sm:$0xff]
      %v190 = vld [vmem:[#allocation13 + $0x20] sm:$0xff]
      %v191 = vld [vmem:[#allocation13 + $0x28] sm:$0xff]
      %v192 = vld [vmem:[#allocation13 + $0x30] sm:$0xff]
      %v193 = vld [vmem:[#allocation13 + $0x38] sm:$0xff]
      %v194 = vld [vmem:[%s2] sm:$0xff]
      %v195 = vld [vmem:[%s2 + $0x8] sm:$0xff]
      %v196 = vld [vmem:[%s2 + $0x10] sm:$0xff]
      %v197 = vld [vmem:[%s2 + $0x18] sm:$0xff]
      %v198 = vld [vmem:[%s2 + $0x20] sm:$0xff]
      %v199 = vld [vmem:[%s2 + $0x28] sm:$0xff]
      %v200 = vld [vmem:[%s2 + $0x30] sm:$0xff]
      %v201 = vld [vmem:[%s2 + $0x38] sm:$0xff]
      %v202 = vadd.f32 %v186, %v194
      %v203 = vadd.f32 %v187, %v195
      %v204 = vadd.f32 %v188, %v196
      %v205 = vadd.f32 %v189, %v197
      %v206 = vadd.f32 %v190, %v198
      %v207 = vadd.f32 %v191, %v199
      %v208 = vadd.f32 %v192, %v200
      %v209 = vadd.f32 %v193, %v201
      %210 = vst [vmem:[#allocation13] sm:$0xff] %v202
      %211 = vst [vmem:[#allocation13 + $0x8] sm:$0xff] %v203
      %212 = vst [vmem:[#allocation13 + $0x10] sm:$0xff] %v204
      %213 = vst [vmem:[#allocation13 + $0x18] sm:$0xff] %v205
      %214 = vst [vmem:[#allocation13 + $0x20] sm:$0xff] %v206
      %215 = vst [vmem:[#allocation13 + $0x28] sm:$0xff] %v207
      %216 = vst [vmem:[#allocation13 + $0x30] sm:$0xff] %v208
      %217 = vst [vmem:[#allocation13 + $0x38] sm:$0xff] %v209
    $region61: #{fluid_steps.1} parent=1 // pred_fallthru
      _
    %v218 = vld [vmem:[#allocation13] sm:$0xff]
    %v219 = vld [vmem:[#allocation13 + $0x8] sm:$0xff]
    %v220 = vld [vmem:[#allocation13 + $0x10] sm:$0xff]
    %v221 = vld [vmem:[#allocation13 + $0x18] sm:$0xff]
    %v222 = vld [vmem:[#allocation13 + $0x20] sm:$0xff]
    %v223 = vld [vmem:[#allocation13 + $0x28] sm:$0xff]
    %v224 = vld [vmem:[#allocation13 + $0x30] sm:$0xff]
    %v225 = vld [vmem:[#allocation13 + $0x38] sm:$0xff]
    %vm226 = vcmp.gt.f32.partialorder %v164, 0.0
    %vm227 = vcmp.gt.f32.partialorder %v165, 0.0
    %vm228 = vcmp.gt.f32.partialorder %v166, 0.0
    %vm229 = vcmp.gt.f32.partialorder %v167, 0.0
    %vm230 = vcmp.gt.f32.partialorder %v168, 0.0
    %vm231 = vcmp.gt.f32.partialorder %v169, 0.0
    %vm232 = vcmp.gt.f32.partialorder %v170, 0.0
    %vm233 = vcmp.gt.f32.partialorder %v171, 0.0
    %vm234 = vcmp.gt.f32.partialorder %v173, 0.0
    %vm235 = vcmp.gt.f32.partialorder %v174, 0.0
    %vm236 = vcmp.gt.f32.partialorder %v175, 0.0
    %vm237 = vcmp.gt.f32.partialorder %v176, 0.0
    %vm238 = vcmp.gt.f32.partialorder %v177, 0.0
    %vm239 = vcmp.gt.f32.partialorder %v178, 0.0
    %vm240 = vcmp.gt.f32.partialorder %v179, 0.0
    %vm241 = vcmp.gt.f32.partialorder %v180, 0.0
    %242 = vrot.lane.b32.xlu0 %v218, 1
    %v243 = vpop.permute.xlu0 %242
    %244 = vrot.lane.b32.xlu0 %v219, 1
    %v245 = vpop.permute.xlu0 %244
    %246 = vrot.lane.b32.xlu0 %v220, 1
    %v247 = vpop.permute.xlu0 %246
    %248 = vrot.lane.b32.xlu0 %v221, 1
    %v249 = vpop.permute.xlu0 %248
    %250 = vrot.lane.b32.xlu0 %v222, 1
    %v251 = vpop.permute.xlu0 %250
    %252 = vrot.lane.b32.xlu0 %v223, 1
    %v253 = vpop.permute.xlu0 %252
    %254 = vrot.lane.b32.xlu0 %v224, 1
    %v255 = vpop.permute.xlu0 %254
    %256 = vrot.lane.b32.xlu0 %v225, 1
    %v257 = vpop.permute.xlu0 %256
    %258 = vrot.lane.b32.xlu0 %v164, 1
    %v259 = vpop.permute.xlu0 %258
    %260 = vrot.lane.b32.xlu0 %v165, 1
    %v261 = vpop.permute.xlu0 %260
    %262 = vrot.lane.b32.xlu0 %v166, 1
    %v263 = vpop.permute.xlu0 %262
    %264 = vrot.lane.b32.xlu0 %v167, 1
    %v265 = vpop.permute.xlu0 %264
    %266 = vrot.lane.b32.xlu0 %v168, 1
    %v267 = vpop.permute.xlu0 %266
    %268 = vrot.lane.b32.xlu0 %v169, 1
    %v269 = vpop.permute.xlu0 %268
    %270 = vrot.lane.b32.xlu0 %v170, 1
    %v271 = vpop.permute.xlu0 %270
    %272 = vrot.lane.b32.xlu0 %v171, 1
    %v273 = vpop.permute.xlu0 %272
    %274 = vrot.lane.b32.xlu0 %v173, 1
    %v275 = vpop.permute.xlu0 %274
    %276 = vrot.lane.b32.xlu0 %v174, 1
    %v277 = vpop.permute.xlu0 %276
    %278 = vrot.lane.b32.xlu0 %v175, 1
    %v279 = vpop.permute.xlu0 %278
    %280 = vrot.lane.b32.xlu0 %v176, 1
    %v281 = vpop.permute.xlu0 %280
    %282 = vrot.lane.b32.xlu0 %v177, 1
    %v283 = vpop.permute.xlu0 %282
    %284 = vrot.lane.b32.xlu0 %v178, 1
    %v285 = vpop.permute.xlu0 %284
    %286 = vrot.lane.b32.xlu0 %v179, 1
    %v287 = vpop.permute.xlu0 %286
    %288 = vrot.lane.b32.xlu0 %v180, 1
    %v289 = vpop.permute.xlu0 %288
    %290 = vrot.lane.b32.xlu0 %v218, 127
    %v291 = vpop.permute.xlu0 %290
    %292 = vrot.lane.b32.xlu0 %v219, 127
    %v293 = vpop.permute.xlu0 %292
    %294 = vrot.lane.b32.xlu0 %v220, 127
    %v295 = vpop.permute.xlu0 %294
    %296 = vrot.lane.b32.xlu0 %v221, 127
    %v297 = vpop.permute.xlu0 %296
    %298 = vrot.lane.b32.xlu0 %v222, 127
    %v299 = vpop.permute.xlu0 %298
    %300 = vrot.lane.b32.xlu0 %v223, 127
    %v301 = vpop.permute.xlu0 %300
    %302 = vrot.lane.b32.xlu0 %v224, 127
    %v303 = vpop.permute.xlu0 %302
    %304 = vrot.lane.b32.xlu0 %v225, 127
    %v305 = vpop.permute.xlu0 %304
    %306 = vrot.lane.b32.xlu0 %v164, 127
    %v307 = vpop.permute.xlu0 %306
    %308 = vrot.lane.b32.xlu0 %v165, 127
    %v309 = vpop.permute.xlu0 %308
    %310 = vrot.lane.b32.xlu0 %v166, 127
    %v311 = vpop.permute.xlu0 %310
    %312 = vrot.lane.b32.xlu0 %v167, 127
    %v313 = vpop.permute.xlu0 %312
    %314 = vrot.lane.b32.xlu0 %v168, 127
    %v315 = vpop.permute.xlu0 %314
    %316 = vrot.lane.b32.xlu0 %v169, 127
    %v317 = vpop.permute.xlu0 %316
    %318 = vrot.lane.b32.xlu0 %v170, 127
    %v319 = vpop.permute.xlu0 %318
    %320 = vrot.lane.b32.xlu0 %v171, 127
    %v321 = vpop.permute.xlu0 %320
    %322 = vrot.lane.b32.xlu0 %v173, 127
    %v323 = vpop.permute.xlu0 %322
    %324 = vrot.lane.b32.xlu0 %v174, 127
    %v325 = vpop.permute.xlu0 %324
    %326 = vrot.lane.b32.xlu0 %v175, 127
    %v327 = vpop.permute.xlu0 %326
    %328 = vrot.lane.b32.xlu0 %v176, 127
    %v329 = vpop.permute.xlu0 %328
    %330 = vrot.lane.b32.xlu0 %v177, 127
    %v331 = vpop.permute.xlu0 %330
    %332 = vrot.lane.b32.xlu0 %v178, 127
    %v333 = vpop.permute.xlu0 %332
    %334 = vrot.lane.b32.xlu0 %v179, 127
    %v335 = vpop.permute.xlu0 %334
    %336 = vrot.lane.b32.xlu0 %v180, 127
    %v337 = vpop.permute.xlu0 %336
    %v338 = vsub.f32 %v218, %v243
    %v339 = vsub.f32 %v219, %v245
    %v340 = vsub.f32 %v220, %v247
    %v341 = vsub.f32 %v221, %v249
    %v342 = vsub.f32 %v222, %v251
    %v343 = vsub.f32 %v223, %v253
    %v344 = vsub.f32 %v224, %v255
    %v345 = vsub.f32 %v225, %v257
    %v346 = vsub.f32 %v291, %v218
    %v347 = vsub.f32 %v293, %v219
    %v348 = vsub.f32 %v295, %v220
    %v349 = vsub.f32 %v297, %v221
    %v350 = vsub.f32 %v299, %v222
    %v351 = vsub.f32 %v301, %v223
    %v352 = vsub.f32 %v303, %v224
    %v353 = vsub.f32 %v305, %v225
    %v354 = vsel %vm226, %v338, %v346
    %v355 = vsel %vm227, %v339, %v347
    %v356 = vsel %vm228, %v340, %v348
    %v357 = vsel %vm229, %v341, %v349
    %v358 = vsel %vm230, %v342, %v350
    %v359 = vsel %vm231, %v343, %v351
    %v360 = vsel %vm232, %v344, %v352
    %v361 = vsel %vm233, %v345, %v353
    %v362 = vrot.slane %v218, 7
    %v363 = vrot.slane %v219, 7
    %v364 = vrot.slane %v220, 7
    %v365 = vrot.slane %v221, 7
    %v366 = vrot.slane %v222, 7
    %v367 = vrot.slane %v223, 7
    %v368 = vrot.slane %v224, 7
    %v369 = vrot.slane %v225, 7
    %v370 = vlaneseq
    %v371 = vshrl.u32 %v370, 7
    %vm372 = vcmp.lt.s32.totalorder %v371, 1
    %v373 = vsel %vm372, %v368, %v369
    %v374 = vsel %vm372, %v367, %v368
    %v375 = vsel %vm372, %v366, %v367
    %v376 = vsel %vm372, %v365, %v366
    %v377 = vsel %vm372, %v364, %v365
    %v378 = vsel %vm372, %v363, %v364
    %v379 = vsel %vm372, %v362, %v363
    %v380 = vsel %vm372, %v369, %v362
    %v381 = vsub.f32 %v218, %v380
    %v382 = vsub.f32 %v219, %v379
    %v383 = vsub.f32 %v220, %v378
    %v384 = vsub.f32 %v221, %v377
    %v385 = vsub.f32 %v222, %v376
    %v386 = vsub.f32 %v223, %v375
    %v387 = vsub.f32 %v224, %v374
    %v388 = vsub.f32 %v225, %v373
    %v389 = vrot.slane %v218, 1
    %v390 = vrot.slane %v219, 1
    %v391 = vrot.slane %v220, 1
    %v392 = vrot.slane %v221, 1
    %v393 = vrot.slane %v222, 1
    %v394 = vrot.slane %v223, 1
    %v395 = vrot.slane %v224, 1
    %v396 = vrot.slane %v225, 1
    %vm397 = vcmp.lt.s32.totalorder %v371, 7
    %v398 = vsel %vm397, %v395, %v396
    %v399 = vsel %vm397, %v394, %v395
    %v400 = vsel %vm397, %v393, %v394
    %v401 = vsel %vm397, %v392, %v393
    %v402 = vsel %vm397, %v391, %v392
    %v403 = vsel %vm397, %v390, %v391
    %v404 = vsel %vm397, %v389, %v390
    %v405 = vsel %vm397, %v396, %v389
    %v406 = vsub.f32 %v404, %v218
    %v407 = vsub.f32 %v403, %v219
    %v408 = vsub.f32 %v402, %v220
    %v409 = vsub.f32 %v401, %v221
    %v410 = vsub.f32 %v400, %v222
    %v411 = vsub.f32 %v399, %v223
    %v412 = vsub.f32 %v398, %v224
    %v413 = vsub.f32 %v405, %v225
    %v414 = vsel %vm234, %v381, %v406
    %v415 = vsel %vm235, %v382, %v407
    %v416 = vsel %vm236, %v383, %v408
    %v417 = vsel %vm237, %v384, %v409
    %v418 = vsel %vm238, %v385, %v410
    %v419 = vsel %vm239, %v386, %v411
    %v420 = vsel %vm240, %v387, %v412
    %v421 = vsel %vm241, %v388, %v413
    %v422 = vmul.f32 %v164, %v354
    %v423 = vmul.f32 %v165, %v355
    %v424 = vmul.f32 %v166, %v356
    %v425 = vmul.f32 %v167, %v357
    %v426 = vmul.f32 %v168, %v358
    %v427 = vmul.f32 %v169, %v359
    %v428 = vmul.f32 %v170, %v360
    %v429 = vmul.f32 %v171, %v361
    %v430 = vmul.f32 %v173, %v414
    %v431 = vmul.f32 %v174, %v415
    %v432 = vmul.f32 %v175, %v416
    %v433 = vmul.f32 %v176, %v417
    %v434 = vmul.f32 %v177, %v418
    %v435 = vmul.f32 %v178, %v419
    %v436 = vmul.f32 %v179, %v420
    %v437 = vmul.f32 %v180, %v421
    %v438 = vadd.f32 %v422, %v430
    %v439 = vadd.f32 %v423, %v431
    %v440 = vadd.f32 %v424, %v432
    %v441 = vadd.f32 %v425, %v433
    %v442 = vadd.f32 %v426, %v434
    %v443 = vadd.f32 %v427, %v435
    %v444 = vadd.f32 %v428, %v436
    %v445 = vadd.f32 %v429, %v437
    %v446 = vstv %s114
    %v447 = vmul.f32 %v446, %v438
    %v448 = vmul.f32 %v446, %v439
    %v449 = vmul.f32 %v446, %v440
    %v450 = vmul.f32 %v446, %v441
    %v451 = vmul.f32 %v446, %v442
    %v452 = vmul.f32 %v446, %v443
    %v453 = vmul.f32 %v446, %v444
    %v454 = vmul.f32 %v446, %v445
    %v455 = vsub.f32 %v218, %v447
    %v456 = vsub.f32 %v219, %v448
    %v457 = vsub.f32 %v220, %v449
    %v458 = vsub.f32 %v221, %v450
    %v459 = vsub.f32 %v222, %v451
    %v460 = vsub.f32 %v223, %v452
    %v461 = vsub.f32 %v224, %v453
    %v462 = vsub.f32 %v225, %v454
    %v463 = vsub.f32 %v164, %v259
    %v464 = vsub.f32 %v165, %v261
    %v465 = vsub.f32 %v166, %v263
    %v466 = vsub.f32 %v167, %v265
    %v467 = vsub.f32 %v168, %v267
    %v468 = vsub.f32 %v169, %v269
    %v469 = vsub.f32 %v170, %v271
    %v470 = vsub.f32 %v171, %v273
    %v471 = vsub.f32 %v307, %v164
    %v472 = vsub.f32 %v309, %v165
    %v473 = vsub.f32 %v311, %v166
    %v474 = vsub.f32 %v313, %v167
    %v475 = vsub.f32 %v315, %v168
    %v476 = vsub.f32 %v317, %v169
    %v477 = vsub.f32 %v319, %v170
    %v478 = vsub.f32 %v321, %v171
    %v479 = vsel %vm226, %v463, %v471
    %v480 = vsel %vm227, %v464, %v472
    %v481 = vsel %vm228, %v465, %v473
    %v482 = vsel %vm229, %v466, %v474
    %v483 = vsel %vm230, %v467, %v475
    %v484 = vsel %vm231, %v468, %v476
    %v485 = vsel %vm232, %v469, %v477
    %v486 = vsel %vm233, %v470, %v478
    %v487 = vrot.slane %v164, 7
    %v488 = vrot.slane %v165, 7
    %v489 = vrot.slane %v166, 7
    %v490 = vrot.slane %v167, 7
    %v491 = vrot.slane %v168, 7
    %v492 = vrot.slane %v169, 7
    %v493 = vrot.slane %v170, 7
    %v494 = vrot.slane %v171, 7
    %v495 = vsel %vm372, %v493, %v494
    %v496 = vsel %vm372, %v492, %v493
    %v497 = vsel %vm372, %v491, %v492
    %v498 = vsel %vm372, %v490, %v491
    %v499 = vsel %vm372, %v489, %v490
    %v500 = vsel %vm372, %v488, %v489
    %v501 = vsel %vm372, %v487, %v488
    %v502 = vsel %vm372, %v494, %v487
    %v503 = vsub.f32 %v164, %v502
    %v504 = vsub.f32 %v165, %v501
    %v505 = vsub.f32 %v166, %v500
    %v506 = vsub.f32 %v167, %v499
    %v507 = vsub.f32 %v168, %v498
    %v508 = vsub.f32 %v169, %v497
    %v509 = vsub.f32 %v170, %v496
    %v510 = vsub.f32 %v171, %v495
    %v511 = vrot.slane %v164, 1
    %v512 = vrot.slane %v165, 1
    %v513 = vrot.slane %v166, 1
    %v514 = vrot.slane %v167, 1
    %v515 = vrot.slane %v168, 1
    %v516 = vrot.slane %v169, 1
    %v517 = vrot.slane %v170, 1
    %v518 = vrot.slane %v171, 1
    %v519 = vsel %vm397, %v517, %v518
    %v520 = vsel %vm397, %v516, %v517
    %v521 = vsel %vm397, %v515, %v516
    %v522 = vsel %vm397, %v514, %v515
    %v523 = vsel %vm397, %v513, %v514
    %v524 = vsel %vm397, %v512, %v513
    %v525 = vsel %vm397, %v511, %v512
    %v526 = vsel %vm397, %v518, %v511
    %v527 = vsub.f32 %v525, %v164
    %v528 = vsub.f32 %v524, %v165
    %v529 = vsub.f32 %v523, %v166
    %v530 = vsub.f32 %v522, %v167
    %v531 = vsub.f32 %v521, %v168
    %v532 = vsub.f32 %v520, %v169
    %v533 = vsub.f32 %v519, %v170
    %v534 = vsub.f32 %v526, %v171
    %v535 = vsel %vm234, %v503, %v527
    %v536 = vsel %vm235, %v504, %v528
    %v537 = vsel %vm236, %v505, %v529
    %v538 = vsel %vm237, %v506, %v530
    %v539 = vsel %vm238, %v507, %v531
    %v540 = vsel %vm239, %v508, %v532
    %v541 = vsel %vm240, %v509, %v533
    %v542 = vsel %vm241, %v510, %v534
    %v543 = vmul.f32 %v164, %v479
    %v544 = vmul.f32 %v165, %v480
    %v545 = vmul.f32 %v166, %v481
    %v546 = vmul.f32 %v167, %v482
    %v547 = vmul.f32 %v168, %v483
    %v548 = vmul.f32 %v169, %v484
    %v549 = vmul.f32 %v170, %v485
    %v550 = vmul.f32 %v171, %v486
    %v551 = vmul.f32 %v173, %v535
    %v552 = vmul.f32 %v174, %v536
    %v553 = vmul.f32 %v175, %v537
    %v554 = vmul.f32 %v176, %v538
    %v555 = vmul.f32 %v177, %v539
    %v556 = vmul.f32 %v178, %v540
    %v557 = vmul.f32 %v179, %v541
    %v558 = vmul.f32 %v180, %v542
    %v559 = vadd.f32 %v543, %v551
    %v560 = vadd.f32 %v544, %v552
    %v561 = vadd.f32 %v545, %v553
    %v562 = vadd.f32 %v546, %v554
    %v563 = vadd.f32 %v547, %v555
    %v564 = vadd.f32 %v548, %v556
    %v565 = vadd.f32 %v549, %v557
    %v566 = vadd.f32 %v550, %v558
    %v567 = vmul.f32 %v446, %v559
    %v568 = vmul.f32 %v446, %v560
    %v569 = vmul.f32 %v446, %v561
    %v570 = vmul.f32 %v446, %v562
    %v571 = vmul.f32 %v446, %v563
    %v572 = vmul.f32 %v446, %v564
    %v573 = vmul.f32 %v446, %v565
    %v574 = vmul.f32 %v446, %v566
    %v575 = vsub.f32 %v164, %v567
    %v576 = vsub.f32 %v165, %v568
    %v577 = vsub.f32 %v166, %v569
    %v578 = vsub.f32 %v167, %v570
    %v579 = vsub.f32 %v168, %v571
    %v580 = vsub.f32 %v169, %v572
    %v581 = vsub.f32 %v170, %v573
    %v582 = vsub.f32 %v171, %v574
    %v583 = vsub.f32 %v173, %v275
    %v584 = vsub.f32 %v174, %v277
    %v585 = vsub.f32 %v175, %v279
    %v586 = vsub.f32 %v176, %v281
    %v587 = vsub.f32 %v177, %v283
    %v588 = vsub.f32 %v178, %v285
    %v589 = vsub.f32 %v179, %v287
    %v590 = vsub.f32 %v180, %v289
    %v591 = vsub.f32 %v323, %v173
    %v592 = vsub.f32 %v325, %v174
    %v593 = vsub.f32 %v327, %v175
    %v594 = vsub.f32 %v329, %v176
    %v595 = vsub.f32 %v331, %v177
    %v596 = vsub.f32 %v333, %v178
    %v597 = vsub.f32 %v335, %v179
    %v598 = vsub.f32 %v337, %v180
    %v599 = vsel %vm226, %v583, %v591
    %v600 = vsel %vm227, %v584, %v592
    %v601 = vsel %vm228, %v585, %v593
    %v602 = vsel %vm229, %v586, %v594
    %v603 = vsel %vm230, %v587, %v595
    %v604 = vsel %vm231, %v588, %v596
    %v605 = vsel %vm232, %v589, %v597
    %v606 = vsel %vm233, %v590, %v598
    %v607 = vrot.slane %v173, 7
    %v608 = vrot.slane %v174, 7
    %v609 = vrot.slane %v175, 7
    %v610 = vrot.slane %v176, 7
    %v611 = vrot.slane %v177, 7
    %v612 = vrot.slane %v178, 7
    %v613 = vrot.slane %v179, 7
    %v614 = vrot.slane %v180, 7
    %v615 = vsel %vm372, %v613, %v614
    %v616 = vsel %vm372, %v612, %v613
    %v617 = vsel %vm372, %v611, %v612
    %v618 = vsel %vm372, %v610, %v611
    %v619 = vsel %vm372, %v609, %v610
    %v620 = vsel %vm372, %v608, %v609
    %v621 = vsel %vm372, %v607, %v608
    %v622 = vsel %vm372, %v614, %v607
    %v623 = vsub.f32 %v173, %v622
    %v624 = vsub.f32 %v174, %v621
    %v625 = vsub.f32 %v175, %v620
    %v626 = vsub.f32 %v176, %v619
    %v627 = vsub.f32 %v177, %v618
    %v628 = vsub.f32 %v178, %v617
    %v629 = vsub.f32 %v179, %v616
    %v630 = vsub.f32 %v180, %v615
    %v631 = vrot.slane %v173, 1
    %v632 = vrot.slane %v174, 1
    %v633 = vrot.slane %v175, 1
    %v634 = vrot.slane %v176, 1
    %v635 = vrot.slane %v177, 1
    %v636 = vrot.slane %v178, 1
    %v637 = vrot.slane %v179, 1
    %v638 = vrot.slane %v180, 1
    %v639 = vsel %vm397, %v637, %v638
    %v640 = vsel %vm397, %v636, %v637
    %v641 = vsel %vm397, %v635, %v636
    %v642 = vsel %vm397, %v634, %v635
    %v643 = vsel %vm397, %v633, %v634
    %v644 = vsel %vm397, %v632, %v633
    %v645 = vsel %vm397, %v631, %v632
    %v646 = vsel %vm397, %v638, %v631
    %v647 = vsub.f32 %v645, %v173
    %v648 = vsub.f32 %v644, %v174
    %v649 = vsub.f32 %v643, %v175
    %v650 = vsub.f32 %v642, %v176
    %v651 = vsub.f32 %v641, %v177
    %v652 = vsub.f32 %v640, %v178
    %v653 = vsub.f32 %v639, %v179
    %v654 = vsub.f32 %v646, %v180
    %v655 = vsel %vm234, %v623, %v647
    %v656 = vsel %vm235, %v624, %v648
    %v657 = vsel %vm236, %v625, %v649
    %v658 = vsel %vm237, %v626, %v650
    %v659 = vsel %vm238, %v627, %v651
    %v660 = vsel %vm239, %v628, %v652
    %v661 = vsel %vm240, %v629, %v653
    %v662 = vsel %vm241, %v630, %v654
    %v663 = vmul.f32 %v164, %v599
    %v664 = vmul.f32 %v165, %v600
    %v665 = vmul.f32 %v166, %v601
    %v666 = vmul.f32 %v167, %v602
    %v667 = vmul.f32 %v168, %v603
    %v668 = vmul.f32 %v169, %v604
    %v669 = vmul.f32 %v170, %v605
    %v670 = vmul.f32 %v171, %v606
    %v671 = vmul.f32 %v173, %v655
    %v672 = vmul.f32 %v174, %v656
    %v673 = vmul.f32 %v175, %v657
    %v674 = vmul.f32 %v176, %v658
    %v675 = vmul.f32 %v177, %v659
    %v676 = vmul.f32 %v178, %v660
    %v677 = vmul.f32 %v179, %v661
    %v678 = vmul.f32 %v180, %v662
    %v679 = vadd.f32 %v663, %v671
    %v680 = vadd.f32 %v664, %v672
    %v681 = vadd.f32 %v665, %v673
    %v682 = vadd.f32 %v666, %v674
    %v683 = vadd.f32 %v667, %v675
    %v684 = vadd.f32 %v668, %v676
    %v685 = vadd.f32 %v669, %v677
    %v686 = vadd.f32 %v670, %v678
    %v687 = vmul.f32 %v446, %v679
    %v688 = vmul.f32 %v446, %v680
    %v689 = vmul.f32 %v446, %v681
    %v690 = vmul.f32 %v446, %v682
    %v691 = vmul.f32 %v446, %v683
    %v692 = vmul.f32 %v446, %v684
    %v693 = vmul.f32 %v446, %v685
    %v694 = vmul.f32 %v446, %v686
    %v695 = vsub.f32 %v173, %v687
    %v696 = vsub.f32 %v174, %v688
    %v697 = vsub.f32 %v175, %v689
    %v698 = vsub.f32 %v176, %v690
    %v699 = vsub.f32 %v177, %v691
    %v700 = vsub.f32 %v178, %v692
    %v701 = vsub.f32 %v179, %v693
    %v702 = vsub.f32 %v180, %v694
    %703 = vst [vmem:[#allocation13] sm:$0xff] %v455
    %704 = vst [vmem:[#allocation13 + $0x8] sm:$0xff] %v456
    %705 = vst [vmem:[#allocation13 + $0x10] sm:$0xff] %v457
    %706 = vst [vmem:[#allocation13 + $0x18] sm:$0xff] %v458
    %707 = vst [vmem:[#allocation13 + $0x20] sm:$0xff] %v459
    %708 = vst [vmem:[#allocation13 + $0x28] sm:$0xff] %v460
    %709 = vst [vmem:[#allocation13 + $0x30] sm:$0xff] %v461
    %710 = vst [vmem:[#allocation13 + $0x38] sm:$0xff] %v462
    %s711 = smul.f32 %s114, %s115
    %v712 = vstv %s711
    %v713 = vmul.f32 %v712, %v455
    %v714 = vmul.f32 %v712, %v456
    %v715 = vmul.f32 %v712, %v457
    %v716 = vmul.f32 %v712, %v458
    %v717 = vmul.f32 %v712, %v459
    %v718 = vmul.f32 %v712, %v460
    %v719 = vmul.f32 %v712, %v461
    %v720 = vmul.f32 %v712, %v462
    %v721 = vadd.f32 %v695, %v713
    %v722 = vadd.f32 %v696, %v714
    %v723 = vadd.f32 %v697, %v715
    %v724 = vadd.f32 %v698, %v716
    %v725 = vadd.f32 %v699, %v717
    %v726 = vadd.f32 %v700, %v718
    %v727 = vadd.f32 %v701, %v719
    %v728 = vadd.f32 %v702, %v720
    %s729 = scalar_lea.vmem %s3, 64
    %v730 = vld [vmem:[%s729] sm:$0xff]
    %v731 = vld [vmem:[%s729 + $0x8] sm:$0xff]
    %v732 = vld [vmem:[%s729 + $0x10] sm:$0xff]
    %v733 = vld [vmem:[%s729 + $0x18] sm:$0xff]
    %v734 = vld [vmem:[%s729 + $0x20] sm:$0xff]
    %v735 = vld [vmem:[%s729 + $0x28] sm:$0xff]
    %v736 = vld [vmem:[%s729 + $0x30] sm:$0xff]
    %v737 = vld [vmem:[%s729 + $0x38] sm:$0xff]
    %v738 = vstv %s113
    %v739 = vmul.f32 %v730, %v738
    %v740 = vmul.f32 %v731, %v738
    %v741 = vmul.f32 %v732, %v738
    %v742 = vmul.f32 %v733, %v738
    %v743 = vmul.f32 %v734, %v738
    %v744 = vmul.f32 %v735, %v738
    %v745 = vmul.f32 %v736, %v738
    %v746 = vmul.f32 %v737, %v738
    %v747 = vmul.f32 %v446, %v739
    %v748 = vmul.f32 %v446, %v740
    %v749 = vmul.f32 %v446, %v741
    %v750 = vmul.f32 %v446, %v742
    %v751 = vmul.f32 %v446, %v743
    %v752 = vmul.f32 %v446, %v744
    %v753 = vmul.f32 %v446, %v745
    %v754 = vmul.f32 %v446, %v746
    %v755 = vadd.f32 %v721, %v747
    %v756 = vadd.f32 %v722, %v748
    %v757 = vadd.f32 %v723, %v749
    %v758 = vadd.f32 %v724, %v750
    %v759 = vadd.f32 %v725, %v751
    %v760 = vadd.f32 %v726, %v752
    %v761 = vadd.f32 %v727, %v753
    %v762 = vadd.f32 %v728, %v754
    %v763 = vld [vmem:[%s3] sm:$0xff]
    %v764 = vld [vmem:[%s3 + $0x8] sm:$0xff]
    %v765 = vld [vmem:[%s3 + $0x10] sm:$0xff]
    %v766 = vld [vmem:[%s3 + $0x18] sm:$0xff]
    %v767 = vld [vmem:[%s3 + $0x20] sm:$0xff]
    %v768 = vld [vmem:[%s3 + $0x28] sm:$0xff]
    %v769 = vld [vmem:[%s3 + $0x30] sm:$0xff]
    %v770 = vld [vmem:[%s3 + $0x38] sm:$0xff]
    %v771 = vmul.f32 %v763, %v738
    %v772 = vmul.f32 %v764, %v738
    %v773 = vmul.f32 %v765, %v738
    %v774 = vmul.f32 %v766, %v738
    %v775 = vmul.f32 %v767, %v738
    %v776 = vmul.f32 %v768, %v738
    %v777 = vmul.f32 %v769, %v738
    %v778 = vmul.f32 %v770, %v738
    %v779 = vmul.f32 %v446, %v771
    %v780 = vmul.f32 %v446, %v772
    %v781 = vmul.f32 %v446, %v773
    %v782 = vmul.f32 %v446, %v774
    %v783 = vmul.f32 %v446, %v775
    %v784 = vmul.f32 %v446, %v776
    %v785 = vmul.f32 %v446, %v777
    %v786 = vmul.f32 %v446, %v778
    %v787 = vadd.f32 %v575, %v779
    %v788 = vadd.f32 %v576, %v780
    %v789 = vadd.f32 %v577, %v781
    %v790 = vadd.f32 %v578, %v782
    %v791 = vadd.f32 %v579, %v783
    %v792 = vadd.f32 %v580, %v784
    %v793 = vadd.f32 %v581, %v785
    %v794 = vadd.f32 %v582, %v786
    %v795 = vld [vmem:[#allocation8] sm:$0xff]
    %v796 = vld [vmem:[#allocation8 + $0x8] sm:$0xff]
    %v797 = vld [vmem:[#allocation8 + $0x10] sm:$0xff]
    %v798 = vld [vmem:[#allocation8 + $0x18] sm:$0xff]
    %v799 = vld [vmem:[#allocation8 + $0x20] sm:$0xff]
    %v800 = vld [vmem:[#allocation8 + $0x28] sm:$0xff]
    %v801 = vld [vmem:[#allocation8 + $0x30] sm:$0xff]
    %v802 = vld [vmem:[#allocation8 + $0x38] sm:$0xff]
    %v803 = vld [vmem:[#allocation8 + $0x40] sm:$0xff]
    %v804 = vld [vmem:[#allocation8 + $0x48] sm:$0xff]
    %v805 = vld [vmem:[#allocation8 + $0x50] sm:$0xff]
    %v806 = vld [vmem:[#allocation8 + $0x58] sm:$0xff]
    %v807 = vld [vmem:[#allocation8 + $0x60] sm:$0xff]
    %v808 = vld [vmem:[#allocation8 + $0x68] sm:$0xff]
    %v809 = vld [vmem:[#allocation8 + $0x70] sm:$0xff]
    %v810 = vld [vmem:[#allocation8 + $0x78] sm:$0xff]
    %v811 = vrot.slane %v755, 1
    %v812 = vrot.slane %v756, 1
    %v813 = vrot.slane %v757, 1
    %v814 = vrot.slane %v758, 1
    %v815 = vrot.slane %v759, 1
    %v816 = vrot.slane %v760, 1
    %v817 = vrot.slane %v761, 1
    %v818 = vrot.slane %v762, 1
    %v819 = vsel %vm397, %v817, %v818
    %v820 = vsel %vm397, %v816, %v817
    %v821 = vsel %vm397, %v815, %v816
    %v822 = vsel %vm397, %v814, %v815
    %v823 = vsel %vm397, %v813, %v814
    %v824 = vsel %vm397, %v812, %v813
    %v825 = vsel %vm397, %v811, %v812
    %v826 = vsel %vm397, %v818, %v811
    %v827 = vrot.slane %v755, 7
    %v828 = vrot.slane %v756, 7
    %v829 = vrot.slane %v757, 7
    %v830 = vrot.slane %v758, 7
    %v831 = vrot.slane %v759, 7
    %v832 = vrot.slane %v760, 7
    %v833 = vrot.slane %v761, 7
    %v834 = vrot.slane %v762, 7
    %v835 = vsel %vm372, %v833, %v834
    %v836 = vsel %vm372, %v832, %v833
    %v837 = vsel %vm372, %v831, %v832
    %v838 = vsel %vm372, %v830, %v831
    %v839 = vsel %vm372, %v829, %v830
    %v840 = vsel %vm372, %v828, %v829
    %v841 = vsel %vm372, %v827, %v828
    %v842 = vsel %vm372, %v834, %v827
    %v843 = vsub.f32 %v825, %v842
    %v844 = vsub.f32 %v824, %v841
    %v845 = vsub.f32 %v823, %v840
    %v846 = vsub.f32 %v822, %v839
    %v847 = vsub.f32 %v821, %v838
    %v848 = vsub.f32 %v820, %v837
    %v849 = vsub.f32 %v819, %v836
    %v850 = vsub.f32 %v826, %v835
    %v851 = vmul.f32 %v843, 0.5
    %v852 = vmul.f32 %v844, 0.5
    %v853 = vmul.f32 %v845, 0.5
    %v854 = vmul.f32 %v846, 0.5
    %v855 = vmul.f32 %v847, 0.5
    %v856 = vmul.f32 %v848, 0.5
    %v857 = vmul.f32 %v849, 0.5
    %v858 = vmul.f32 %v850, 0.5
    %859 = vmatpush.msra.mxu0 %v810
    %860 = vmatpush.msra.mxu0 %v809
    %861 = vmatpush.msra.mxu0 %v808
    %862 = vmatpush.msra.mxu0 %v807
    %863 = vmatpush.msra.mxu0 %v806
    %864 = vmatpush.msra.mxu0 %v805
    %865 = vmatpush.msra.mxu0 %v804
    %866 = vmatpush.msra.mxu0 %v803
    %867 = vmatpush.msra.mxu0 %v802
    %868 = vmatpush.msra.mxu0 %v801
    %869 = vmatpush.msra.mxu0 %v800
    %870 = vmatpush.msra.mxu0 %v799
    %871 = vmatpush.msra.mxu0 %v798
    %872 = vmatpush.msra.mxu0 %v797
    %873 = vmatpush.msra.mxu0 %v796
    %874 = vmatpush.msra.mxu0 %v795
    %875 = vmatmul.f32.gmra.mxu0 %v787
    %v876 = vpop.f32.mrf.mxu0
    %v877 = vadd.f32 %v851, %v876
    %878 = vmatmul.f32.gmra.mxu0 %v788
    %v879 = vpop.f32.mrf.mxu0
    %v880 = vadd.f32 %v852, %v879
    %881 = vmatmul.f32.gmra.mxu0 %v789
    %v882 = vpop.f32.mrf.mxu0
    %v883 = vadd.f32 %v853, %v882
    %884 = vmatmul.f32.gmra.mxu0 %v790
    %v885 = vpop.f32.mrf.mxu0
    %v886 = vadd.f32 %v854, %v885
    %887 = vmatmul.f32.gmra.mxu0 %v791
    %v888 = vpop.f32.mrf.mxu0
    %v889 = vadd.f32 %v855, %v888
    %890 = vmatmul.f32.gmra.mxu0 %v792
    %v891 = vpop.f32.mrf.mxu0
    %v892 = vadd.f32 %v856, %v891
    %893 = vmatmul.f32.gmra.mxu0 %v793
    %v894 = vpop.f32.mrf.mxu0
    %v895 = vadd.f32 %v857, %v894
    %896 = vmatmul.f32.gmra.mxu0 %v794
    %v897 = vpop.f32.mrf.mxu0
    %v898 = vadd.f32 %v858, %v897
    %899 = vdwg.mxu0
    %900 = vst [vmem:[#allocation14] sm:$0xff] %v787
    %901 = vst [vmem:[#allocation14 + $0x8] sm:$0xff] %v788
    %902 = vst [vmem:[#allocation14 + $0x10] sm:$0xff] %v789
    %903 = vst [vmem:[#allocation14 + $0x18] sm:$0xff] %v790
    %904 = vst [vmem:[#allocation14 + $0x20] sm:$0xff] %v791
    %905 = vst [vmem:[#allocation14 + $0x28] sm:$0xff] %v792
    %906 = vst [vmem:[#allocation14 + $0x30] sm:$0xff] %v793
    %907 = vst [vmem:[#allocation14 + $0x38] sm:$0xff] %v794
    %908 = vst [vmem:[%s172] sm:$0xff] %v755
    %909 = vst [vmem:[%s172 + $0x8] sm:$0xff] %v756
    %910 = vst [vmem:[%s172 + $0x10] sm:$0xff] %v757
    %911 = vst [vmem:[%s172 + $0x18] sm:$0xff] %v758
    %912 = vst [vmem:[%s172 + $0x20] sm:$0xff] %v759
    %913 = vst [vmem:[%s172 + $0x28] sm:$0xff] %v760
    %914 = vst [vmem:[%s172 + $0x30] sm:$0xff] %v761
    %915 = vst [vmem:[%s172 + $0x38] sm:$0xff] %v762
    %v916 = vmul.f32 %v877, 0.25
    %v917 = vmul.f32 %v880, 0.25
    %v918 = vmul.f32 %v883, 0.25
    %v919 = vmul.f32 %v886, 0.25
    %v920 = vmul.f32 %v889, 0.25
    %v921 = vmul.f32 %v892, 0.25
    %v922 = vmul.f32 %v895, 0.25
    %v923 = vmul.f32 %v898, 0.25
    loop: start=0, step=1, limit=5
    $region62: #{fluid_steps.1} parent=1 // loop_pre_header
      _
    $region63: #{fluid_steps.1} parent=1 // loop_header
      %s925 = sphi 0, %s929
      %p926 = scmp.ge.s32.totalorder %s925, 5
      %v930 = vphi 0.0, %v1339
      %v931 = vphi 0.0, %v1340
      %v932 = vphi 0.0, %v1341
      %v933 = vphi 0.0, %v1342
      %v934 = vphi 0.0, %v1343
      %v935 = vphi 0.0, %v1344
      %v936 = vphi 0.0, %v1345
      %v937 = vphi 0.0, %v1346
    $region64: #{fluid_steps.1} parent=1 // loop_header_branch
      %928 = sbr.rel (%p926) target = $region68
    $region65: #{fluid_steps.1} parent=1 // loop_body
      %v938 = vld [vmem:[%s4] sm:$0xff]
      %v939 = vld [vmem:[%s4 + $0x8] sm:$0xff]
      %v940 = vld [vmem:[%s4 + $0x10] sm:$0xff]
      %v941 = vld [vmem:[%s4 + $0x18] sm:$0xff]
      %v942 = vld [vmem:[%s4 + $0x20] sm:$0xff]
      %v943 = vld [vmem:[%s4 + $0x28] sm:$0xff]
      %v944 = vld [vmem:[%s4 + $0x30] sm:$0xff]
      %v945 = vld [vmem:[%s4 + $0x38] sm:$0xff]
      %v946 = vld [vmem:[%s4 + $0x40] sm:$0xff]
      %v947 = vld [vmem:[%s4 + $0x48] sm:$0xff]
      %v948 = vld [vmem:[%s4 + $0x50] sm:$0xff]
      %v949 = vld [vmem:[%s4 + $0x58] sm:$0xff]
      %v950 = vld [vmem:[%s4 + $0x60] sm:$0xff]
      %v951 = vld [vmem:[%s4 + $0x68] sm:$0xff]
      %v952 = vld [vmem:[%s4 + $0x70] sm:$0xff]
      %v953 = vld [vmem:[%s4 + $0x78] sm:$0xff]
      %v954 = vld [vmem:[#allocation7] sm:$0xff]
      %v955 = vld [vmem:[#allocation7 + $0x8] sm:$0xff]
      %v956 = vld [vmem:[#allocation7 + $0x10] sm:$0xff]
      %v957 = vld [vmem:[#allocation7 + $0x18] sm:$0xff]
      %v958 = vld [vmem:[#allocation7 + $0x20] sm:$0xff]
      %v959 = vld [vmem:[#allocation7 + $0x28] sm:$0xff]
      %v960 = vld [vmem:[#allocation7 + $0x30] sm:$0xff]
      %v961 = vld [vmem:[#allocation7 + $0x38] sm:$0xff]
      %vm962 = vcmask 523264
      %v964 = vsel %vm962, %v954, 0
      %v967 = vsel %vm962, %v955, 0
      %v970 = vsel %vm962, %v956, 0
      %v973 = vsel %vm962, %v957, 0
      %v976 = vsel %vm962, %v958, 0
      %v979 = vsel %vm962, %v959, 0
      %v982 = vsel %vm962, %v960, 0
      %v985 = vsel %vm962, %v961, 0
      %987 = vmatpush.msra.mxu0 0.0
      %988 = vmatpush.msra.mxu0 0.0
      %989 = vmatpush.msra.mxu0 0.0
      %990 = vmatpush.msra.mxu0 0.0
      %991 = vmatpush.msra.mxu0 0.0
      %992 = vmatpush.msra.mxu0 0.0
      %993 = vmatpush.msra.mxu0 0.0
      %994 = vmatpush.msra.mxu0 0.0
      %995 = vmatpush.msra.mxu0 %v937
      %996 = vmatpush.msra.mxu0 %v936
      %997 = vmatpush.msra.mxu0 %v935
      %998 = vmatpush.msra.mxu0 %v934
      %999 = vmatpush.msra.mxu0 %v933
      %1000 = vmatpush.msra.mxu0 %v932
      %1001 = vmatpush.msra.mxu0 %v931
      %1002 = vmatpush.msra.mxu0 %v930
      %1003 = vmatmul.f32.gmra.mxu0 %v964
      %v1004 = vpop.f32.mrf.mxu0
      %v1005 = vadd.f32 0.0, %v1004
      %1006 = vmatmul.f32.gmra.mxu0 %v967
      %v1007 = vpop.f32.mrf.mxu0
      %v1008 = vadd.f32 0.0, %v1007
      %1009 = vmatmul.f32.gmra.mxu0 %v970
      %v1010 = vpop.f32.mrf.mxu0
      %v1011 = vadd.f32 0.0, %v1010
      %1012 = vmatmul.f32.gmra.mxu0 %v973
      %v1013 = vpop.f32.mrf.mxu0
      %v1014 = vadd.f32 0.0, %v1013
      %1015 = vmatmul.f32.gmra.mxu0 %v976
      %v1016 = vpop.f32.mrf.mxu0
      %v1017 = vadd.f32 0.0, %v1016
      %1018 = vmatmul.f32.gmra.mxu0 %v979
      %v1019 = vpop.f32.mrf.mxu0
      %v1020 = vadd.f32 0.0, %v1019
      %1021 = vmatmul.f32.gmra.mxu0 %v982
      %v1022 = vpop.f32.mrf.mxu0
      %v1023 = vadd.f32 0.0, %v1022
      %1024 = vmatmul.f32.gmra.mxu0 %v985
      %v1025 = vpop.f32.mrf.mxu0
      %v1026 = vadd.f32 0.0, %v1025
      %1027 = vdwg.mxu0
      %1028 = vmatpush.msra.mxu0 %v953
      %1029 = vmatpush.msra.mxu0 %v952
      %1030 = vmatpush.msra.mxu0 %v951
      %1031 = vmatpush.msra.mxu0 %v950
      %1032 = vmatpush.msra.mxu0 %v949
      %1033 = vmatpush.msra.mxu0 %v948
      %1034 = vmatpush.msra.mxu0 %v947
      %1035 = vmatpush.msra.mxu0 %v946
      %1036 = vmatpush.msra.mxu0 %v945
      %1037 = vmatpush.msra.mxu0 %v944
      %1038 = vmatpush.msra.mxu0 %v943
      %1039 = vmatpush.msra.mxu0 %v942
      %1040 = vmatpush.msra.mxu0 %v941
      %1041 = vmatpush.msra.mxu0 %v940
      %1042 = vmatpush.msra.mxu0 %v939
      %1043 = vmatpush.msra.mxu0 %v938
      %1044 = vmatmul.f32.gmra.mxu0 %v930
      %v1045 = vpop.f32.mrf.mxu0
      %v1046 = vadd.f32 %v1005, %v1045
      %1047 = vmatmul.f32.gmra.mxu0 %v931
      %v1048 = vpop.f32.mrf.mxu0
      %v1049 = vadd.f32 %v1008, %v1048
      %1050 = vmatmul.f32.gmra.mxu0 %v932
      %v1051 = vpop.f32.mrf.mxu0
      %v1052 = vadd.f32 %v1011, %v1051
      %1053 = vmatmul.f32.gmra.mxu0 %v933
      %v1054 = vpop.f32.mrf.mxu0
      %v1055 = vadd.f32 %v1014, %v1054
      %1056 = vmatmul.f32.gmra.mxu0 %v934
      %v1057 = vpop.f32.mrf.mxu0
      %v1058 = vadd.f32 %v1017, %v1057
      %1059 = vmatmul.f32.gmra.mxu0 %v935
      %v1060 = vpop.f32.mrf.mxu0
      %v1061 = vadd.f32 %v1020, %v1060
      %1062 = vmatmul.f32.gmra.mxu0 %v936
      %v1063 = vpop.f32.mrf.mxu0
      %v1064 = vadd.f32 %v1023, %v1063
      %1065 = vmatmul.f32.gmra.mxu0 %v937
      %v1066 = vpop.f32.mrf.mxu0
      %v1067 = vadd.f32 %v1026, %v1066
      %1068 = vdwg.mxu0
      %v1069 = vsub.f32 %v1046, %v916
      %v1070 = vsub.f32 %v1049, %v917
      %v1071 = vsub.f32 %v1052, %v918
      %v1072 = vsub.f32 %v1055, %v919
      %v1073 = vsub.f32 %v1058, %v920
      %v1074 = vsub.f32 %v1061, %v921
      %v1075 = vsub.f32 %v1064, %v922
      %v1076 = vsub.f32 %v1067, %v923
      %1077 = vmatpush.msra.mxu0 0.0
      %1078 = vmatpush.msra.mxu0 0.0
      %1079 = vmatpush.msra.mxu0 0.0
      %1080 = vmatpush.msra.mxu0 0.0
      %1081 = vmatpush.msra.mxu0 0.0
      %1082 = vmatpush.msra.mxu0 0.0
      %1083 = vmatpush.msra.mxu0 0.0
      %1084 = vmatpush.msra.mxu0 0.0
      %1085 = vmatpush.msra.mxu0 %v1076
      %1086 = vmatpush.msra.mxu0 %v1075
      %1087 = vmatpush.msra.mxu0 %v1074
      %1088 = vmatpush.msra.mxu0 %v1073
      %1089 = vmatpush.msra.mxu0 %v1072
      %1090 = vmatpush.msra.mxu0 %v1071
      %1091 = vmatpush.msra.mxu0 %v1070
      %1092 = vmatpush.msra.mxu0 %v1069
      %1093 = vmatmul.f32.gmra.mxu0 %v964
      %v1094 = vpop.f32.mrf.mxu0
      %v1095 = vadd.f32 0.0, %v1094
      %1096 = vmatmul.f32.gmra.mxu0 %v967
      %v1097 = vpop.f32.mrf.mxu0
      %v1098 = vadd.f32 0.0, %v1097
      %1099 = vmatmul.f32.gmra.mxu0 %v970
      %v1100 = vpop.f32.mrf.mxu0
      %v1101 = vadd.f32 0.0, %v1100
      %1102 = vmatmul.f32.gmra.mxu0 %v973
      %v1103 = vpop.f32.mrf.mxu0
      %v1104 = vadd.f32 0.0, %v1103
      %1105 = vmatmul.f32.gmra.mxu0 %v976
      %v1106 = vpop.f32.mrf.mxu0
      %v1107 = vadd.f32 0.0, %v1106
      %1108 = vmatmul.f32.gmra.mxu0 %v979
      %v1109 = vpop.f32.mrf.mxu0
      %v1110 = vadd.f32 0.0, %v1109
      %1111 = vmatmul.f32.gmra.mxu0 %v982
      %v1112 = vpop.f32.mrf.mxu0
      %v1113 = vadd.f32 0.0, %v1112
      %1114 = vmatmul.f32.gmra.mxu0 %v985
      %v1115 = vpop.f32.mrf.mxu0
      %v1116 = vadd.f32 0.0, %v1115
      %1117 = vdwg.mxu0
      %1118 = vmatpush.msra.mxu0 %v953
      %1119 = vmatpush.msra.mxu0 %v952
      %1120 = vmatpush.msra.mxu0 %v951
      %1121 = vmatpush.msra.mxu0 %v950
      %1122 = vmatpush.msra.mxu0 %v949
      %1123 = vmatpush.msra.mxu0 %v948
      %1124 = vmatpush.msra.mxu0 %v947
      %1125 = vmatpush.msra.mxu0 %v946
      %1126 = vmatpush.msra.mxu0 %v945
      %1127 = vmatpush.msra.mxu0 %v944
      %1128 = vmatpush.msra.mxu0 %v943
      %1129 = vmatpush.msra.mxu0 %v942
      %1130 = vmatpush.msra.mxu0 %v941
      %1131 = vmatpush.msra.mxu0 %v940
      %1132 = vmatpush.msra.mxu0 %v939
      %1133 = vmatpush.msra.mxu0 %v938
      %1134 = vmatmul.f32.gmra.mxu0 %v1069
      %v1135 = vpop.f32.mrf.mxu0
      %v1136 = vadd.f32 %v1095, %v1135
      %1137 = vmatmul.f32.gmra.mxu0 %v1070
      %v1138 = vpop.f32.mrf.mxu0
      %v1139 = vadd.f32 %v1098, %v1138
      %1140 = vmatmul.f32.gmra.mxu0 %v1071
      %v1141 = vpop.f32.mrf.mxu0
      %v1142 = vadd.f32 %v1101, %v1141
      %1143 = vmatmul.f32.gmra.mxu0 %v1072
      %v1144 = vpop.f32.mrf.mxu0
      %v1145 = vadd.f32 %v1104, %v1144
      %1146 = vmatmul.f32.gmra.mxu0 %v1073
      %v1147 = vpop.f32.mrf.mxu0
      %v1148 = vadd.f32 %v1107, %v1147
      %1149 = vmatmul.f32.gmra.mxu0 %v1074
      %v1150 = vpop.f32.mrf.mxu0
      %v1151 = vadd.f32 %v1110, %v1150
      %1152 = vmatmul.f32.gmra.mxu0 %v1075
      %v1153 = vpop.f32.mrf.mxu0
      %v1154 = vadd.f32 %v1113, %v1153
      %1155 = vmatmul.f32.gmra.mxu0 %v1076
      %v1156 = vpop.f32.mrf.mxu0
      %v1157 = vadd.f32 %v1116, %v1156
      %1158 = vdwg.mxu0
      %v1159 = vsub.f32 %v1136, %v916
      %v1160 = vsub.f32 %v1139, %v917
      %v1161 = vsub.f32 %v1142, %v918
      %v1162 = vsub.f32 %v1145, %v919
      %v1163 = vsub.f32 %v1148, %v920
      %v1164 = vsub.f32 %v1151, %v921
      %v1165 = vsub.f32 %v1154, %v922
      %v1166 = vsub.f32 %v1157, %v923
      %1167 = vmatpush.msra.mxu0 0.0
      %1168 = vmatpush.msra.mxu0 0.0
      %1169 = vmatpush.msra.mxu0 0.0
      %1170 = vmatpush.msra.mxu0 0.0
      %1171 = vmatpush.msra.mxu0 0.0
      %1172 = vmatpush.msra.mxu0 0.0
      %1173 = vmatpush.msra.mxu0 0.0
      %1174 = vmatpush.msra.mxu0 0.0
      %1175 = vmatpush.msra.mxu0 %v1166
      %1176 = vmatpush.msra.mxu0 %v1165
      %1177 = vmatpush.msra.mxu0 %v1164
      %1178 = vmatpush.msra.mxu0 %v1163
      %1179 = vmatpush.msra.mxu0 %v1162
      %1180 = vmatpush.msra.mxu0 %v1161
      %1181 = vmatpush.msra.mxu0 %v1160
      %1182 = vmatpush.msra.mxu0 %v1159
      %1183 = vmatmul.f32.gmra.mxu0 %v964
      %v1184 = vpop.f32.mrf.mxu0
      %v1185 = vadd.f32 0.0, %v1184
      %1186 = vmatmul.f32.gmra.mxu0 %v967
      %v1187 = vpop.f32.mrf.mxu0
      %v1188 = vadd.f32 0.0, %v1187
      %1189 = vmatmul.f32.gmra.mxu0 %v970
      %v1190 = vpop.f32.mrf.mxu0
      %v1191 = vadd.f32 0.0, %v1190
      %1192 = vmatmul.f32.gmra.mxu0 %v973
      %v1193 = vpop.f32.mrf.mxu0
      %v1194 = vadd.f32 0.0, %v1193
      %1195 = vmatmul.f32.gmra.mxu0 %v976
      %v1196 = vpop.f32.mrf.mxu0
      %v1197 = vadd.f32 0.0, %v1196
      %1198 = vmatmul.f32.gmra.mxu0 %v979
      %v1199 = vpop.f32.mrf.mxu0
      %v1200 = vadd.f32 0.0, %v1199
      %1201 = vmatmul.f32.gmra.mxu0 %v982
      %v1202 = vpop.f32.mrf.mxu0
      %v1203 = vadd.f32 0.0, %v1202
      %1204 = vmatmul.f32.gmra.mxu0 %v985
      %v1205 = vpop.f32.mrf.mxu0
      %v1206 = vadd.f32 0.0, %v1205
      %1207 = vdwg.mxu0
      %1208 = vmatpush.msra.mxu0 %v953
      %1209 = vmatpush.msra.mxu0 %v952
      %1210 = vmatpush.msra.mxu0 %v951
      %1211 = vmatpush.msra.mxu0 %v950
      %1212 = vmatpush.msra.mxu0 %v949
      %1213 = vmatpush.msra.mxu0 %v948
      %1214 = vmatpush.msra.mxu0 %v947
      %1215 = vmatpush.msra.mxu0 %v946
      %1216 = vmatpush.msra.mxu0 %v945
      %1217 = vmatpush.msra.mxu0 %v944
      %1218 = vmatpush.msra.mxu0 %v943
      %1219 = vmatpush.msra.mxu0 %v942
      %1220 = vmatpush.msra.mxu0 %v941
      %1221 = vmatpush.msra.mxu0 %v940
      %1222 = vmatpush.msra.mxu0 %v939
      %1223 = vmatpush.msra.mxu0 %v938
      %1224 = vmatmul.f32.gmra.mxu0 %v1159
      %v1225 = vpop.f32.mrf.mxu0
      %v1226 = vadd.f32 %v1185, %v1225
      %1227 = vmatmul.f32.gmra.mxu0 %v1160
      %v1228 = vpop.f32.mrf.mxu0
      %v1229 = vadd.f32 %v1188, %v1228
      %1230 = vmatmul.f32.gmra.mxu0 %v1161
      %v1231 = vpop.f32.mrf.mxu0
      %v1232 = vadd.f32 %v1191, %v1231
      %1233 = vmatmul.f32.gmra.mxu0 %v1162
      %v1234 = vpop.f32.mrf.mxu0
      %v1235 = vadd.f32 %v1194, %v1234
      %1236 = vmatmul.f32.gmra.mxu0 %v1163
      %v1237 = vpop.f32.mrf.mxu0
      %v1238 = vadd.f32 %v1197, %v1237
      %1239 = vmatmul.f32.gmra.mxu0 %v1164
      %v1240 = vpop.f32.mrf.mxu0
      %v1241 = vadd.f32 %v1200, %v1240
      %1242 = vmatmul.f32.gmra.mxu0 %v1165
      %v1243 = vpop.f32.mrf.mxu0
      %v1244 = vadd.f32 %v1203, %v1243
      %1245 = vmatmul.f32.gmra.mxu0 %v1166
      %v1246 = vpop.f32.mrf.mxu0
      %v1247 = vadd.f32 %v1206, %v1246
      %1248 = vdwg.mxu0
      %v1249 = vsub.f32 %v1226, %v916
      %v1250 = vsub.f32 %v1229, %v917
      %v1251 = vsub.f32 %v1232, %v918
      %v1252 = vsub.f32 %v1235, %v919
      %v1253 = vsub.f32 %v1238, %v920
      %v1254 = vsub.f32 %v1241, %v921
      %v1255 = vsub.f32 %v1244, %v922
      %v1256 = vsub.f32 %v1247, %v923
      %1257 = vmatpush.msra.mxu0 0.0
      %1258 = vmatpush.msra.mxu0 0.0
      %1259 = vmatpush.msra.mxu0 0.0
      %1260 = vmatpush.msra.mxu0 0.0
      %1261 = vmatpush.msra.mxu0 0.0
      %1262 = vmatpush.msra.mxu0 0.0
      %1263 = vmatpush.msra.mxu0 0.0
      %1264 = vmatpush.msra.mxu0 0.0
      %1265 = vmatpush.msra.mxu0 %v1256
      %1266 = vmatpush.msra.mxu0 %v1255
      %1267 = vmatpush.msra.mxu0 %v1254
      %1268 = vmatpush.msra.mxu0 %v1253
      %1269 = vmatpush.msra.mxu0 %v1252
      %1270 = vmatpush.msra.mxu0 %v1251
      %1271 = vmatpush.msra.mxu0 %v1250
      %1272 = vmatpush.msra.mxu0 %v1249
      %1273 = vmatmul.f32.gmra.mxu0 %v964
      %v1274 = vpop.f32.mrf.mxu0
      %v1275 = vadd.f32 0.0, %v1274
      %1276 = vmatmul.f32.gmra.mxu0 %v967
      %v1277 = vpop.f32.mrf.mxu0
      %v1278 = vadd.f32 0.0, %v1277
      %1279 = vmatmul.f32.gmra.mxu0 %v970
      %v1280 = vpop.f32.mrf.mxu0
      %v1281 = vadd.f32 0.0, %v1280
      %1282 = vmatmul.f32.gmra.mxu0 %v973
      %v1283 = vpop.f32.mrf.mxu0
      %v1284 = vadd.f32 0.0, %v1283
      %1285 = vmatmul.f32.gmra.mxu0 %v976
      %v1286 = vpop.f32.mrf.mxu0
      %v1287 = vadd.f32 0.0, %v1286
      %1288 = vmatmul.f32.gmra.mxu0 %v979
      %v1289 = vpop.f32.mrf.mxu0
      %v1290 = vadd.f32 0.0, %v1289
      %1291 = vmatmul.f32.gmra.mxu0 %v982
      %v1292 = vpop.f32.mrf.mxu0
      %v1293 = vadd.f32 0.0, %v1292
      %1294 = vmatmul.f32.gmra.mxu0 %v985
      %v1295 = vpop.f32.mrf.mxu0
      %v1296 = vadd.f32 0.0, %v1295
      %1297 = vdwg.mxu0
      %1298 = vmatpush.msra.mxu0 %v953
      %1299 = vmatpush.msra.mxu0 %v952
      %1300 = vmatpush.msra.mxu0 %v951
      %1301 = vmatpush.msra.mxu0 %v950
      %1302 = vmatpush.msra.mxu0 %v949
      %1303 = vmatpush.msra.mxu0 %v948
      %1304 = vmatpush.msra.mxu0 %v947
      %1305 = vmatpush.msra.mxu0 %v946
      %1306 = vmatpush.msra.mxu0 %v945
      %1307 = vmatpush.msra.mxu0 %v944
      %1308 = vmatpush.msra.mxu0 %v943
      %1309 = vmatpush.msra.mxu0 %v942
      %1310 = vmatpush.msra.mxu0 %v941
      %1311 = vmatpush.msra.mxu0 %v940
      %1312 = vmatpush.msra.mxu0 %v939
      %1313 = vmatpush.msra.mxu0 %v938
      %1314 = vmatmul.f32.gmra.mxu0 %v1249
      %v1315 = vpop.f32.mrf.mxu0
      %v1316 = vadd.f32 %v1275, %v1315
      %1317 = vmatmul.f32.gmra.mxu0 %v1250
      %v1318 = vpop.f32.mrf.mxu0
      %v1319 = vadd.f32 %v1278, %v1318
      %1320 = vmatmul.f32.gmra.mxu0 %v1251
      %v1321 = vpop.f32.mrf.mxu0
      %v1322 = vadd.f32 %v1281, %v1321
      %1323 = vmatmul.f32.gmra.mxu0 %v1252
      %v1324 = vpop.f32.mrf.mxu0
      %v1325 = vadd.f32 %v1284, %v1324
      %1326 = vmatmul.f32.gmra.mxu0 %v1253
      %v1327 = vpop.f32.mrf.mxu0
      %v1328 = vadd.f32 %v1287, %v1327
      %1329 = vmatmul.f32.gmra.mxu0 %v1254
      %v1330 = vpop.f32.mrf.mxu0
      %v1331 = vadd.f32 %v1290, %v1330
      %1332 = vmatmul.f32.gmra.mxu0 %v1255
      %v1333 = vpop.f32.mrf.mxu0
      %v1334 = vadd.f32 %v1293, %v1333
      %1335 = vmatmul.f32.gmra.mxu0 %v1256
      %v1336 = vpop.f32.mrf.mxu0
      %v1337 = vadd.f32 %v1296, %v1336
      %1338 = vdwg.mxu0
      %v1339 = vsub.f32 %v1316, %v916
      %v1340 = vsub.f32 %v1319, %v917
      %v1341 = vsub.f32 %v1322, %v918
      %v1342 = vsub.f32 %v1325, %v919
      %v1343 = vsub.f32 %v1328, %v920
      %v1344 = vsub.f32 %v1331, %v921
      %v1345 = vsub.f32 %v1334, %v922
      %v1346 = vsub.f32 %v1337, %v923
    $region66: #{fluid_steps.1} parent=1 // loop_footer
      %s929 = sadd.s32 1, %s925
    $region67: #{fluid_steps.1} parent=1 // loop_footer_branch
      %924 = sbr.rel target = $region63
    $region68: #{fluid_steps.1} parent=1 // loop_exit
      _
    %v1347 = vld [vmem:[#allocation14] sm:$0xff]
    %v1348 = vld [vmem:[#allocation14 + $0x8] sm:$0xff]
    %v1349 = vld [vmem:[#allocation14 + $0x10] sm:$0xff]
    %v1350 = vld [vmem:[#allocation14 + $0x18] sm:$0xff]
    %v1351 = vld [vmem:[#allocation14 + $0x20] sm:$0xff]
    %v1352 = vld [vmem:[#allocation14 + $0x28] sm:$0xff]
    %v1353 = vld [vmem:[#allocation14 + $0x30] sm:$0xff]
    %v1354 = vld [vmem:[#allocation14 + $0x38] sm:$0xff]
    %v1355 = vld [vmem:[#allocation8] sm:$0xff]
    %v1356 = vld [vmem:[#allocation8 + $0x8] sm:$0xff]
    %v1357 = vld [vmem:[#allocation8 + $0x10] sm:$0xff]
    %v1358 = vld [vmem:[#allocation8 + $0x18] sm:$0xff]
    %v1359 = vld [vmem:[#allocation8 + $0x20] sm:$0xff]
    %v1360 = vld [vmem:[#allocation8 + $0x28] sm:$0xff]
    %v1361 = vld [vmem:[#allocation8 + $0x30] sm:$0xff]
    %v1362 = vld [vmem:[#allocation8 + $0x38] sm:$0xff]
    %v1363 = vld [vmem:[#allocation8 + $0x40] sm:$0xff]
    %v1364 = vld [vmem:[#allocation8 + $0x48] sm:$0xff]
    %v1365 = vld [vmem:[#allocation8 + $0x50] sm:$0xff]
    %v1366 = vld [vmem:[#allocation8 + $0x58] sm:$0xff]
    %v1367 = vld [vmem:[#allocation8 + $0x60] sm:$0xff]
    %v1368 = vld [vmem:[#allocation8 + $0x68] sm:$0xff]
    %v1369 = vld [vmem:[#allocation8 + $0x70] sm:$0xff]
    %v1370 = vld [vmem:[#allocation8 + $0x78] sm:$0xff]
    %1371 = vmatpush.msra.mxu0 %v1370
    %1372 = vmatpush.msra.mxu0 %v1369
    %1373 = vmatpush.msra.mxu0 %v1368
    %1374 = vmatpush.msra.mxu0 %v1367
    %1375 = vmatpush.msra.mxu0 %v1366
    %1376 = vmatpush.msra.mxu0 %v1365
    %1377 = vmatpush.msra.mxu0 %v1364
    %1378 = vmatpush.msra.mxu0 %v1363
    %1379 = vmatpush.msra.mxu0 %v1362
    %1380 = vmatpush.msra.mxu0 %v1361
    %1381 = vmatpush.msra.mxu0 %v1360
    %1382 = vmatpush.msra.mxu0 %v1359
    %1383 = vmatpush.msra.mxu0 %v1358
    %1384 = vmatpush.msra.mxu0 %v1357
    %1385 = vmatpush.msra.mxu0 %v1356
    %1386 = vmatpush.msra.mxu0 %v1355
    %1387 = vmatmul.f32.gmra.mxu0 %v930
    %v1388 = vpop.f32.mrf.mxu0
    %v1389 = vadd.f32 0.0, %v1388
    %1390 = vmatmul.f32.gmra.mxu0 %v931
    %v1391 = vpop.f32.mrf.mxu0
    %v1392 = vadd.f32 0.0, %v1391
    %1393 = vmatmul.f32.gmra.mxu0 %v932
    %v1394 = vpop.f32.mrf.mxu0
    %v1395 = vadd.f32 0.0, %v1394
    %1396 = vmatmul.f32.gmra.mxu0 %v933
    %v1397 = vpop.f32.mrf.mxu0
    %v1398 = vadd.f32 0.0, %v1397
    %1399 = vmatmul.f32.gmra.mxu0 %v934
    %v1400 = vpop.f32.mrf.mxu0
    %v1401 = vadd.f32 0.0, %v1400
    %1402 = vmatmul.f32.gmra.mxu0 %v935
    %v1403 = vpop.f32.mrf.mxu0
    %v1404 = vadd.f32 0.0, %v1403
    %1405 = vmatmul.f32.gmra.mxu0 %v936
    %v1406 = vpop.f32.mrf.mxu0
    %v1407 = vadd.f32 0.0, %v1406
    %1408 = vmatmul.f32.gmra.mxu0 %v937
    %v1409 = vpop.f32.mrf.mxu0
    %v1410 = vadd.f32 0.0, %v1409
    %1411 = vdwg.mxu0
    %v1412 = vsub.f32 %v1347, %v1389
    %v1413 = vsub.f32 %v1348, %v1392
    %v1414 = vsub.f32 %v1349, %v1395
    %v1415 = vsub.f32 %v1350, %v1398
    %v1416 = vsub.f32 %v1351, %v1401
    %v1417 = vsub.f32 %v1352, %v1404
    %v1418 = vsub.f32 %v1353, %v1407
    %v1419 = vsub.f32 %v1354, %v1410
    %v1420 = vld [vmem:[%s172] sm:$0xff]
    %v1421 = vld [vmem:[%s172 + $0x8] sm:$0xff]
    %v1422 = vld [vmem:[%s172 + $0x10] sm:$0xff]
    %v1423 = vld [vmem:[%s172 + $0x18] sm:$0xff]
    %v1424 = vld [vmem:[%s172 + $0x20] sm:$0xff]
    %v1425 = vld [vmem:[%s172 + $0x28] sm:$0xff]
    %v1426 = vld [vmem:[%s172 + $0x30] sm:$0xff]
    %v1427 = vld [vmem:[%s172 + $0x38] sm:$0xff]
    %v1428 = vrot.slane %v930, 1
    %v1429 = vrot.slane %v931, 1
    %v1430 = vrot.slane %v932, 1
    %v1431 = vrot.slane %v933, 1
    %v1432 = vrot.slane %v934, 1
    %v1433 = vrot.slane %v935, 1
    %v1434 = vrot.slane %v936, 1
    %v1435 = vrot.slane %v937, 1
    %v1436 = vsel %vm397, %v1434, %v1435
    %v1437 = vsel %vm397, %v1433, %v1434
    %v1438 = vsel %vm397, %v1432, %v1433
    %v1439 = vsel %vm397, %v1431, %v1432
    %v1440 = vsel %vm397, %v1430, %v1431
    %v1441 = vsel %vm397, %v1429, %v1430
    %v1442 = vsel %vm397, %v1428, %v1429
    %v1443 = vsel %vm397, %v1435, %v1428
    %v1444 = vrot.slane %v930, 7
    %v1445 = vrot.slane %v931, 7
    %v1446 = vrot.slane %v932, 7
    %v1447 = vrot.slane %v933, 7
    %v1448 = vrot.slane %v934, 7
    %v1449 = vrot.slane %v935, 7
    %v1450 = vrot.slane %v936, 7
    %v1451 = vrot.slane %v937, 7
    %v1452 = vsel %vm372, %v1450, %v1451
    %v1453 = vsel %vm372, %v1449, %v1450
    %v1454 = vsel %vm372, %v1448, %v1449
    %v1455 = vsel %vm372, %v1447, %v1448
    %v1456 = vsel %vm372, %v1446, %v1447
    %v1457 = vsel %vm372, %v1445, %v1446
    %v1458 = vsel %vm372, %v1444, %v1445
    %v1459 = vsel %vm372, %v1451, %v1444
    %v1460 = vsub.f32 %v1442, %v1459
    %v1461 = vsub.f32 %v1441, %v1458
    %v1462 = vsub.f32 %v1440, %v1457
    %v1463 = vsub.f32 %v1439, %v1456
    %v1464 = vsub.f32 %v1438, %v1455
    %v1465 = vsub.f32 %v1437, %v1454
    %v1466 = vsub.f32 %v1436, %v1453
    %v1467 = vsub.f32 %v1443, %v1452
    %v1468 = vmul.f32 %v1460, 0.5
    %v1469 = vmul.f32 %v1461, 0.5
    %v1470 = vmul.f32 %v1462, 0.5
    %v1471 = vmul.f32 %v1463, 0.5
    %v1472 = vmul.f32 %v1464, 0.5
    %v1473 = vmul.f32 %v1465, 0.5
    %v1474 = vmul.f32 %v1466, 0.5
    %v1475 = vmul.f32 %v1467, 0.5
    %v1476 = vsub.f32 %v1420, %v1468
    %v1477 = vsub.f32 %v1421, %v1469
    %v1478 = vsub.f32 %v1422, %v1470
    %v1479 = vsub.f32 %v1423, %v1471
    %v1480 = vsub.f32 %v1424, %v1472
    %v1481 = vsub.f32 %v1425, %v1473
    %v1482 = vsub.f32 %v1426, %v1474
    %v1483 = vsub.f32 %v1427, %v1475
    %1484 = vst [vmem:[#allocation14] sm:$0xff] %v1412
    %1485 = vst [vmem:[#allocation14 + $0x8] sm:$0xff] %v1413
    %1486 = vst [vmem:[#allocation14 + $0x10] sm:$0xff] %v1414
    %1487 = vst [vmem:[#allocation14 + $0x18] sm:$0xff] %v1415
    %1488 = vst [vmem:[#allocation14 + $0x20] sm:$0xff] %v1416
    %1489 = vst [vmem:[#allocation14 + $0x28] sm:$0xff] %v1417
    %1490 = vst [vmem:[#allocation14 + $0x30] sm:$0xff] %v1418
    %1491 = vst [vmem:[#allocation14 + $0x38] sm:$0xff] %v1419
    %1492 = vst [vmem:[%s172] sm:$0xff] %v1476
    %1493 = vst [vmem:[%s172 + $0x8] sm:$0xff] %v1477
    %1494 = vst [vmem:[%s172 + $0x10] sm:$0xff] %v1478
    %1495 = vst [vmem:[%s172 + $0x18] sm:$0xff] %v1479
    %1496 = vst [vmem:[%s172 + $0x20] sm:$0xff] %v1480
    %1497 = vst [vmem:[%s172 + $0x28] sm:$0xff] %v1481
    %1498 = vst [vmem:[%s172 + $0x30] sm:$0xff] %v1482
    %1499 = vst [vmem:[%s172 + $0x38] sm:$0xff] %v1483
    // Predicated region
    $region69: #{fluid_steps.1} parent=1 // pred_check
      _
    $region70: #{fluid_steps.1} parent=1 // pred_check_branch
      %1501 = sbr.rel (0) target = $region72
    $region71: #{fluid_steps.1} parent=1 // pred_region
      %1503 = vsyncadd [#allocation5], 0
      %s1504 = sshll.u32 [#allocation13], 4
      %s1505 = int_to_ptr.vmem [resolvable:$true] %s1504
      %s1506 = sshll.u32 %s9, 4
      %s1507 = int_to_ptr.hbm [resolvable:$true] %s1506
      %1512 = dma.vmem_to_hbm [thread:$0]  %s1505, 1024, %s1507, [#allocation5], 128, 128, 8
    $region72: #{fluid_steps.1} parent=1 // pred_fallthru
      _
    // Predicated region
    $region73: #{fluid_steps.1} parent=1 // pred_check
      _
    $region74: #{fluid_steps.1} parent=1 // pred_check_branch
      %1514 = sbr.rel (0) target = $region76
    $region75: #{fluid_steps.1} parent=1 // pred_region
      %1516 = vsyncadd [#allocation15], 0
      %s1517 = sshll.u32 [#allocation14], 4
      %s1518 = int_to_ptr.vmem [resolvable:$true] %s1517
      %s1519 = sshll.u32 %s10, 4
      %s1520 = int_to_ptr.hbm [resolvable:$true] %s1519
      %1525 = dma.vmem_to_hbm [thread:$0]  %s1518, 2048, %s1520, [#allocation15], 128, 128, 8
    $region76: #{fluid_steps.1} parent=1 // pred_fallthru
      _
    // Predicated region
    $region77: #{fluid_steps.1} parent=1 // pred_check
      _
    $region78: #{fluid_steps.1} parent=1 // pred_check_branch
      %1527 = sbr.rel (0) target = $region80
    $region79: #{fluid_steps.1} parent=1 // pred_region
      %1529 = dma.done [#allocation5], 1024
    $region80: #{fluid_steps.1} parent=1 // pred_fallthru
      _
    // Predicated region
    $region81: #{fluid_steps.1} parent=1 // pred_check
      _
    $region82: #{fluid_steps.1} parent=1 // pred_check_branch
      %1531 = sbr.rel (0) target = $region84
    $region83: #{fluid_steps.1} parent=1 // pred_region
      %1533 = dma.done [#allocation15], 2048
    $region84: #{fluid_steps.1} parent=1 // pred_fallthru
      _
    %1534 = vsyncpa [#allocation4], 1
    %1535 = vsyncpa [#allocation9], 1
    %1536 = vsyncpa [#allocation12], 1
    %1537 = vsyncpa [#allocation5], 1
    %1538 = vsyncpa [#allocation15], 1
    %1539 = vsyncpa [#allocation6], 1

</llo_original>
